<compile_context>
chip_gen: v5e
topology: v5e:2x2
jax: 0.10.0
libtpu: 0.0.40
codegen_flags: <defaults>
</compile_context>

<pallas_src>
import functools

import numpy as np

import jax
import jax.numpy as jnp
from jax.experimental import pallas as pl
from jax.experimental.pallas import tpu as pltpu

G = 4           # params['g_order']
K = 3           # depthwise kernel size used by PDRREBlock (k=3, s=1, p=1)
BN_EPS = 1e-5


# ------------------------------ fused kernel ------------------------------

def _pdrre_fused_kernel(x_ref, w1_ref, wpw_ref, wdw_ref, w2_ref, mask_ref,
                        bmid_ref, bout_ref, o_ref, *, n, W, added):
    """Whole PDRREBlock forward for one batch element, activations in VMEM.

    Layout: activations are [C_flat, M] with C_flat = c*G + r (torch .view
    flattening) and M = h*W + w on the (dense) lane axis.
    """
    f32 = jnp.float32
    x = x_ref[0]                       # [Cin, M]  f32
    masks = mask_ref[...]              # [9, M]    f32 in {0, 1}
    M = x.shape[-1]

    def pw(a, w_bf16):
        # Transposed 1x1 RRE conv: [Cout, Cin] @ [Cin, M] -> [Cout, M].
        # bf16 operands, f32 accumulation; lane axis (M) stays dense.
        return jnp.dot(w_bf16, a.astype(jnp.bfloat16),
                       preferred_element_type=f32)

    def shift_silu(a, b):
        # eval-mode BatchNorm (scale already folded into weights) + SiLU, f32
        a = a + b
        return a * jax.nn.sigmoid(a)

    def dw3x3(a, taps):
        # Same-padded 3x3 depthwise conv in flat [C, M] layout: spatial shift
        # (di, dj) is a lane roll by -(di*W + dj); wrap-around and image
        # borders are zeroed by the precomputed per-tap masks.  Centre tap
        # needs neither the roll nor the mask.
        acc = None
        t = 0
        for di in (-1, 0, 1):
            for dj in (-1, 0, 1):
                if di == 0 and dj == 0:
                    term = a * taps[:, t:t + 1]
                else:
                    d = di * W + dj
                    shifted = pltpu.roll(a, shift=(-d) % M, axis=1)
                    term = (shifted * masks[t:t + 1, :]) * taps[:, t:t + 1]
                acc = term if acc is None else acc + term
                t += 1
        return acc

    b_mid = bmid_ref[...]

    # conv1: PointwiseRRECBA(c1, c_)
    y = shift_silu(pw(x, w1_ref[...]), b_mid)

    # n x _Bottleneck(c_): (pw -> dw -> BN -> SiLU) x2, then + input
    for l in range(n):
        t1 = shift_silu(dw3x3(pw(y, wpw_ref[2 * l]), wdw_ref[2 * l]), b_mid)
        t2 = shift_silu(dw3x3(pw(t1, wpw_ref[2 * l + 1]), wdw_ref[2 * l + 1]),
                        b_mid)
        y = t2 + y

    # conv2: PointwiseRRECBA(c_, c2), plus input residual when c1 == c2
    out = shift_silu(pw(y, w2_ref[...]), bout_ref[...])
    if added:
        out = out + x
    o_ref[0] = out.astype(o_ref.dtype)


# ------------------------------ wrapper ------------------------------

def _tap_masks(H, W):
    """[9, H*W] {0,1} validity mask per 3x3 tap (row-major tap order)."""
    h = np.repeat(np.arange(H), W)
    w = np.tile(np.arange(W), H)
    rows = []
    for di in (-1, 0, 1):
        for dj in (-1, 0, 1):
            rows.append(((h + di >= 0) & (h + di < H) &
                         (w + dj >= 0) & (w + dj < W)).astype(np.float32))
    return jnp.asarray(np.stack(rows, axis=0))


def pdrre_block_forward(wts, x5):
    """x5: [B, C1, G, H, W] float32  ->  [B, C2, G, H, W] float32."""
    B, C1, g, H, W = x5.shape
    Cin = C1 * g
    Cmid = wts['w1'].shape[0]
    Cout = wts['w2'].shape[0]
    n = wts['pw'].shape[0] // 2
    added = (Cin == Cout)              # c1 == c2
    assert n >= 1
    M = H * W

    x = x5.reshape(B, Cin, M)          # torch-native NCHW flattening (free)
    masks = _tap_masks(H, W)           # trace-time constant under jit

    kernel = functools.partial(_pdrre_fused_kernel, n=n, W=W, added=added)
    out = pl.pallas_call(
        kernel,
        out_shape=jax.ShapeDtypeStruct((B, Cout, M), jnp.float32),
        grid=(B,),
        in_specs=[
            pl.BlockSpec((1, Cin, M), lambda b: (b, 0, 0)),          # x
            pl.BlockSpec((Cmid, Cin), lambda b: (0, 0)),             # w1 (bf16)
            pl.BlockSpec((2 * n, Cmid, Cmid), lambda b: (0, 0, 0)),  # pw_a/pw_b
            pl.BlockSpec((2 * n, Cmid, K * K), lambda b: (0, 0, 0)), # dw taps
            pl.BlockSpec((Cout, Cmid), lambda b: (0, 0)),            # w2 (bf16)
            pl.BlockSpec((K * K, M), lambda b: (0, 0)),              # tap masks
            pl.BlockSpec((Cmid, 1), lambda b: (0, 0)),               # BN shift c_
            pl.BlockSpec((Cout, 1), lambda b: (0, 0)),               # BN shift c2
        ],
        out_specs=pl.BlockSpec((1, Cout, M), lambda b: (b, 0, 0)),
        compiler_params=pltpu.CompilerParams(
            dimension_semantics=("parallel",),      # v7x megacore over batch
            vmem_limit_bytes=32 * 1024 * 1024),
    )(x, wts['w1'], wts['pw'], wts['dw'], wts['w2'], masks,
      wts['b_mid'], wts['b_out'])
    return out.reshape(B, Cout // g, g, H, W)


# ---------------- parameters & one-time weight prep ----------------

def kaiming_uniform(key, shape, fan_in):
    # matches nn.init.kaiming_uniform_(w, a=sqrt(5)): U(-1/sqrt(fan_in), 1/sqrt(fan_in))
    bound = 1.0 / (fan_in ** 0.5)
    return jax.random.uniform(key, shape, jnp.float32, -bound, bound)


def init_params(key, c1, c2, n=1, g=G):
    c_ = int(c2 * 0.75)
    keys = jax.random.split(key, 2 + 4 * n)
    params = {
        'pw1': kaiming_uniform(keys[0], (c_, c1, g), c1 * g),
        'pw2': kaiming_uniform(keys[1], (c2, c_, g), c_ * g),
        'bottlenecks': [],
    }
    for i in range(n):
        ks = keys[2 + 4 * i: 2 + 4 * (i + 1)]
        params['bottlenecks'].append({
            'pw_a': kaiming_uniform(ks[0], (c_, c_, g), c_ * g),
            'dw_a': kaiming_uniform(ks[1], (c_, K, K), K * K),
            'gb_a': jnp.zeros((c_, g, K, K), jnp.float32),   # params['std'] == 0
            'pw_b': kaiming_uniform(ks[2], (c_, c_, g), c_ * g),
            'dw_b': kaiming_uniform(ks[3], (c_, K, K), K * K),
            'gb_b': jnp.zeros((c_, g, K, K), jnp.float32),
        })
    return params


def build_pw_weight(pw, g=G):
    """pw: (c2, c1, g) -> [c2*g, c1*g] (out, in); replicates build_pw_filters()."""
    c2, c1, _ = pw.shape
    rolled = jnp.stack([jnp.roll(pw, i, axis=-1) for i in range(g)], axis=1)
    return rolled.reshape(c2 * g, c1 * g)


def build_dw_taps(dw, g_bias, g=G):
    """dw: (c, k, k), g_bias: (c, g, k, k) -> [c*g, k*k]; replicates build_dw_filters()."""
    rots = jnp.stack([jnp.rot90(dw, k=r, axes=(-2, -1)) for r in range(g)], axis=1)
    filt = rots + g_bias
    c = filt.shape[0]
    return filt.reshape(c * g, K * K)


def bn_fold(c, g=G, eps=BN_EPS):
    """Eval-mode BatchNorm3d with default params, folded to per-(c*g) scale/shift."""
    weight = jnp.ones((c,), jnp.float32)
    bias = jnp.zeros((c,), jnp.float32)
    mean = jnp.zeros((c,), jnp.float32)
    var = jnp.ones((c,), jnp.float32)
    scale = weight * jax.lax.rsqrt(var + eps)
    shift = bias - mean * scale
    return (jnp.repeat(scale, g).reshape(-1, 1),
            jnp.repeat(shift, g).reshape(-1, 1))


def prepare_weights(params, g=G):
    """One-time weight/filter/BN construction (hoisted off the forward path)."""
    w1 = build_pw_weight(params['pw1'], g)               # [Cmid, Cin]
    w2 = build_pw_weight(params['pw2'], g)               # [Cout, Cmid]
    pw, dw = [], []
    for b in params['bottlenecks']:
        pw += [build_pw_weight(b['pw_a'], g), build_pw_weight(b['pw_b'], g)]
        dw += [build_dw_taps(b['dw_a'], b['gb_a'], g),
               build_dw_taps(b['dw_b'], b['gb_b'], g)]
    s_mid, b_mid = bn_fold(w1.shape[0] // g, g)
    s_out, b_out = bn_fold(w2.shape[0] // g, g)
    # Fold the eval-mode BN *scale* into whatever op directly feeds the BN:
    #   conv1 / conv2 -> pointwise weights; bottleneck stages -> depthwise
    #   taps (BN sits after the dw conv there).  Exact per-channel math.
    w1 = w1 * s_mid
    w2 = w2 * s_out
    dw = [t * s_mid for t in dw]
    return {
        'w1': w1.astype(jnp.bfloat16),               # [Cmid, Cin]
        'w2': w2.astype(jnp.bfloat16),               # [Cout, Cmid]
        'pw': jnp.stack(pw).astype(jnp.bfloat16),    # [2n, Cmid, Cmid]
        'dw': jnp.stack(dw).astype(jnp.float32),     # [2n, Cmid, 9]
        'b_mid': b_mid, 'b_out': b_out,              # BN shifts (scale folded)
    }


# ---------------- pure-JAX reference (correctness check) ----------------

def reference_forward(wts, x5):
    B, C1, g, H, W = x5.shape
    M = H * W
    Cin = C1 * g
    Cmid = wts['w1'].shape[0]
    Cout = wts['w2'].shape[0]
    n = wts['pw'].shape[0] // 2
    added = (Cin == Cout)
    x = x5.reshape(B, Cin, M).astype(jnp.float32)

    def pw(a, w):
        return jnp.einsum('oi,bim->bom', w, a.astype(jnp.bfloat16),
                          preferred_element_type=jnp.float32)

    def shift_silu(a, b):
        a = a + b[None]
        return a * jax.nn.sigmoid(a)

    def dw(a, taps):
        a4 = a.reshape(B, Cmid, H, W)
        ap = jnp.pad(a4, ((0, 0), (0, 0), (1, 1), (1, 1)))
        out = jnp.zeros_like(a4)
        t = 0
        for ki in range(K):
            for kj in range(K):
                out = out + ap[:, :, ki:ki + H, kj:kj + W] * taps[:, t][None, :, None, None]
                t += 1
        return out.reshape(B, Cmid, M)

    y = shift_silu(pw(x, wts['w1']), wts['b_mid'])
    for l in range(n):
        t1 = shift_silu(dw(pw(y, wts['pw'][2 * l]), wts['dw'][2 * l]), wts['b_mid'])
        t2 = shift_silu(dw(pw(t1, wts['pw'][2 * l + 1]), wts['dw'][2 * l + 1]), wts['b_mid'])
        y = t2 + y
    out = shift_silu(pw(y, wts['w2']), wts['b_out'])
    if added:
        out = out + x
    return out.reshape(B, Cout // g, g, H, W)


# ----------------------------------- main -----------------------------------

if __name__ == "__main__":
    key = jax.random.PRNGKey(0)
    kx, kp = jax.random.split(key)

    B, C1, C2, H, W, N = 2, 4, 4, 16, 16, 1     # c_ = int(0.75*4) = 3, added = True
    # torch-equivalent input [B, C1, G, H, W]; M = H*W = 256 (lane-dense)
    x5 = jax.random.normal(kx, (B, C1, G, H, W), jnp.float32)

    params = init_params(kp, C1, C2, n=N)
    wts = prepare_weights(params)               # hoisted, one-time

    fwd = jax.jit(pdrre_block_forward)
    out = fwd(wts, x5)
    jax.block_until_ready(out)

    ref = reference_forward(wts, x5)
    assert out.shape == (B, C2, G, H, W)
    assert bool(jnp.all(jnp.isfinite(out)))
    max_err = float(jnp.max(jnp.abs(out - ref)))
    assert max_err < 1e-2, f"mismatch vs reference: max abs err {max_err}"
    print("KERNEL_OK")
</pallas_src>

<mosaic_0001>
module attributes {stable_mosaic.version = 11 : i64} {
  func.func @_pdrre_fused_kernel(%arg0: i32, %arg1: memref<1x16x256xf32, #tpu.memory_space<vmem>>, %arg2: memref<12x16xbf16, #tpu.memory_space<vmem>>, %arg3: memref<2x12x12xbf16, #tpu.memory_space<vmem>>, %arg4: memref<2x12x9xf32, #tpu.memory_space<vmem>>, %arg5: memref<16x12xbf16, #tpu.memory_space<vmem>>, %arg6: memref<9x256xf32, #tpu.memory_space<vmem>>, %arg7: memref<12x1xf32, #tpu.memory_space<vmem>>, %arg8: memref<16x1xf32, #tpu.memory_space<vmem>>, %arg9: memref<1x16x256xf32, #tpu.memory_space<vmem>>) attributes {dimension_semantics = [#tpu.dimension_semantics<parallel>], iteration_bounds = array<i64: 2>, scalar_prefetch = 0 : i64, scratch_operands = 0 : i64, tpu.core_type = #tpu.core_type<tc>, window_params = [{transform_indices = @transform_0, window_bounds = array<i64: 1, 16, 256>}, {pipeline_mode = #tpu.pipeline_mode<synchronous>, transform_indices = @transform_1, window_bounds = array<i64: 12, 16>}, {pipeline_mode = #tpu.pipeline_mode<synchronous>, transform_indices = @transform_2, window_bounds = array<i64: 2, 12, 12>}, {pipeline_mode = #tpu.pipeline_mode<synchronous>, transform_indices = @transform_3, window_bounds = array<i64: 2, 12, 9>}, {pipeline_mode = #tpu.pipeline_mode<synchronous>, transform_indices = @transform_4, window_bounds = array<i64: 16, 12>}, {pipeline_mode = #tpu.pipeline_mode<synchronous>, transform_indices = @transform_5, window_bounds = array<i64: 9, 256>}, {pipeline_mode = #tpu.pipeline_mode<synchronous>, transform_indices = @transform_6, window_bounds = array<i64: 12, 1>}, {pipeline_mode = #tpu.pipeline_mode<synchronous>, transform_indices = @transform_7, window_bounds = array<i64: 16, 1>}, {transform_indices = @transform_8, window_bounds = array<i64: 1, 16, 256>}]} {
    %c0 = arith.constant 0 : index
    %c0_0 = arith.constant 0 : index
    %c0_1 = arith.constant 0 : index
    %0 = vector.load %arg1[%c0, %c0_0, %c0_1] : memref<1x16x256xf32, #tpu.memory_space<vmem>>, vector<1x16x256xf32>
    %1 = vector.shape_cast %0 : vector<1x16x256xf32> to vector<16x256xf32>
    %c0_2 = arith.constant 0 : index
    %c0_3 = arith.constant 0 : index
    %2 = vector.load %arg6[%c0_2, %c0_3] : memref<9x256xf32, #tpu.memory_space<vmem>>, vector<9x256xf32>
    %c0_4 = arith.constant 0 : index
    %c0_5 = arith.constant 0 : index
    %3 = vector.load %arg7[%c0_4, %c0_5] : memref<12x1xf32, #tpu.memory_space<vmem>>, vector<12x1xf32>
    %c0_6 = arith.constant 0 : index
    %c0_7 = arith.constant 0 : index
    %4 = vector.load %arg2[%c0_6, %c0_7] : memref<12x16xbf16, #tpu.memory_space<vmem>>, vector<12x16xbf16>
    %5 = arith.truncf %1 : vector<16x256xf32> to vector<16x256xbf16>
    %cst = arith.constant dense<0.000000e+00> : vector<12x256xf32>
    %6 = tpu.matmul %4, %5, %cst {dimension_numbers = #tpu.dot_dimension_numbers<[1], [0], [0], [1], [0, 0, 1, 1], [], []>} : vector<12x16xbf16>, vector<16x256xbf16>, vector<12x256xf32> -> vector<12x256xf32>
    %7 = vector.broadcast %3 : vector<12x1xf32> to vector<12x256xf32>
    %8 = arith.addf %6, %7 : vector<12x256xf32>
    %9 = arith.negf %8 : vector<12x256xf32>
    %10 = math.exp %9 : vector<12x256xf32>
    %cst_8 = arith.constant 1.000000e+00 : f32
    %11 = vector.broadcast %cst_8 : f32 to vector<12x256xf32>
    %12 = arith.addf %11, %10 : vector<12x256xf32>
    %13 = arith.divf %11, %12 : vector<12x256xf32>
    %14 = arith.mulf %8, %13 : vector<12x256xf32>
    %c0_9 = arith.constant 0 : index
    %c0_10 = arith.constant 0 : index
    %c0_11 = arith.constant 0 : index
    %15 = vector.load %arg3[%c0_9, %c0_10, %c0_11] : memref<2x12x12xbf16, #tpu.memory_space<vmem>>, vector<1x12x12xbf16>
    %16 = vector.shape_cast %15 : vector<1x12x12xbf16> to vector<12x12xbf16>
    %17 = arith.truncf %14 : vector<12x256xf32> to vector<12x256xbf16>
    %cst_12 = arith.constant dense<0.000000e+00> : vector<12x256xf32>
    %18 = tpu.matmul %16, %17, %cst_12 {dimension_numbers = #tpu.dot_dimension_numbers<[1], [0], [0], [1], [0, 0, 1, 1], [], []>} : vector<12x12xbf16>, vector<12x256xbf16>, vector<12x256xf32> -> vector<12x256xf32>
    %c0_13 = arith.constant 0 : index
    %c0_14 = arith.constant 0 : index
    %c0_15 = arith.constant 0 : index
    %19 = vector.load %arg4[%c0_13, %c0_14, %c0_15] : memref<2x12x9xf32, #tpu.memory_space<vmem>>, vector<1x12x9xf32>
    %20 = vector.shape_cast %19 : vector<1x12x9xf32> to vector<12x9xf32>
    %c17_i32 = arith.constant 17 : i32
    %21 = tpu.dynamic_rotate %18 by %c17_i32 dim 1 : vector<12x256xf32>, i32 -> vector<12x256xf32>
    %22 = vector.extract_strided_slice %2 {offsets = [0, 0], sizes = [1, 256], strides = [1, 1]} : vector<9x256xf32> to vector<1x256xf32>
    %23 = vector.broadcast %22 : vector<1x256xf32> to vector<12x256xf32>
    %24 = arith.mulf %21, %23 : vector<12x256xf32>
    %25 = vector.extract_strided_slice %20 {offsets = [0, 0], sizes = [12, 1], strides = [1, 1]} : vector<12x9xf32> to vector<12x1xf32>
    %26 = vector.broadcast %25 : vector<12x1xf32> to vector<12x256xf32>
    %27 = arith.mulf %24, %26 : vector<12x256xf32>
    %c16_i32 = arith.constant 16 : i32
    %28 = tpu.dynamic_rotate %18 by %c16_i32 dim 1 : vector<12x256xf32>, i32 -> vector<12x256xf32>
    %29 = vector.extract_strided_slice %2 {offsets = [1, 0], sizes = [1, 256], strides = [1, 1]} : vector<9x256xf32> to vector<1x256xf32>
    %30 = vector.broadcast %29 : vector<1x256xf32> to vector<12x256xf32>
    %31 = arith.mulf %28, %30 : vector<12x256xf32>
    %32 = vector.extract_strided_slice %20 {offsets = [0, 1], sizes = [12, 1], strides = [1, 1]} : vector<12x9xf32> to vector<12x1xf32>
    %33 = vector.broadcast %32 : vector<12x1xf32> to vector<12x256xf32>
    %34 = arith.mulf %31, %33 : vector<12x256xf32>
    %35 = arith.addf %27, %34 : vector<12x256xf32>
    %c15_i32 = arith.constant 15 : i32
    %36 = tpu.dynamic_rotate %18 by %c15_i32 dim 1 : vector<12x256xf32>, i32 -> vector<12x256xf32>
    %37 = vector.extract_strided_slice %2 {offsets = [2, 0], sizes = [1, 256], strides = [1, 1]} : vector<9x256xf32> to vector<1x256xf32>
    %38 = vector.broadcast %37 : vector<1x256xf32> to vector<12x256xf32>
    %39 = arith.mulf %36, %38 : vector<12x256xf32>
    %40 = vector.extract_strided_slice %20 {offsets = [0, 2], sizes = [12, 1], strides = [1, 1]} : vector<12x9xf32> to vector<12x1xf32>
    %41 = vector.broadcast %40 : vector<12x1xf32> to vector<12x256xf32>
    %42 = arith.mulf %39, %41 : vector<12x256xf32>
    %43 = arith.addf %35, %42 : vector<12x256xf32>
    %c1_i32 = arith.constant 1 : i32
    %44 = tpu.dynamic_rotate %18 by %c1_i32 dim 1 : vector<12x256xf32>, i32 -> vector<12x256xf32>
    %45 = vector.extract_strided_slice %2 {offsets = [3, 0], sizes = [1, 256], strides = [1, 1]} : vector<9x256xf32> to vector<1x256xf32>
    %46 = vector.broadcast %45 : vector<1x256xf32> to vector<12x256xf32>
    %47 = arith.mulf %44, %46 : vector<12x256xf32>
    %48 = vector.extract_strided_slice %20 {offsets = [0, 3], sizes = [12, 1], strides = [1, 1]} : vector<12x9xf32> to vector<12x1xf32>
    %49 = vector.broadcast %48 : vector<12x1xf32> to vector<12x256xf32>
    %50 = arith.mulf %47, %49 : vector<12x256xf32>
    %51 = arith.addf %43, %50 : vector<12x256xf32>
    %52 = vector.extract_strided_slice %20 {offsets = [0, 4], sizes = [12, 1], strides = [1, 1]} : vector<12x9xf32> to vector<12x1xf32>
    %53 = vector.broadcast %52 : vector<12x1xf32> to vector<12x256xf32>
    %54 = arith.mulf %18, %53 : vector<12x256xf32>
    %55 = arith.addf %51, %54 : vector<12x256xf32>
    %c255_i32 = arith.constant 255 : i32
    %56 = tpu.dynamic_rotate %18 by %c255_i32 dim 1 : vector<12x256xf32>, i32 -> vector<12x256xf32>
    %57 = vector.extract_strided_slice %2 {offsets = [5, 0], sizes = [1, 256], strides = [1, 1]} : vector<9x256xf32> to vector<1x256xf32>
    %58 = vector.broadcast %57 : vector<1x256xf32> to vector<12x256xf32>
    %59 = arith.mulf %56, %58 : vector<12x256xf32>
    %60 = vector.extract_strided_slice %20 {offsets = [0, 5], sizes = [12, 1], strides = [1, 1]} : vector<12x9xf32> to vector<12x1xf32>
    %61 = vector.broadcast %60 : vector<12x1xf32> to vector<12x256xf32>
    %62 = arith.mulf %59, %61 : vector<12x256xf32>
    %63 = arith.addf %55, %62 : vector<12x256xf32>
    %c241_i32 = arith.constant 241 : i32
    %64 = tpu.dynamic_rotate %18 by %c241_i32 dim 1 : vector<12x256xf32>, i32 -> vector<12x256xf32>
    %65 = vector.extract_strided_slice %2 {offsets = [6, 0], sizes = [1, 256], strides = [1, 1]} : vector<9x256xf32> to vector<1x256xf32>
    %66 = vector.broadcast %65 : vector<1x256xf32> to vector<12x256xf32>
    %67 = arith.mulf %64, %66 : vector<12x256xf32>
    %68 = vector.extract_strided_slice %20 {offsets = [0, 6], sizes = [12, 1], strides = [1, 1]} : vector<12x9xf32> to vector<12x1xf32>
    %69 = vector.broadcast %68 : vector<12x1xf32> to vector<12x256xf32>
    %70 = arith.mulf %67, %69 : vector<12x256xf32>
    %71 = arith.addf %63, %70 : vector<12x256xf32>
    %c240_i32 = arith.constant 240 : i32
    %72 = tpu.dynamic_rotate %18 by %c240_i32 dim 1 : vector<12x256xf32>, i32 -> vector<12x256xf32>
    %73 = vector.extract_strided_slice %2 {offsets = [7, 0], sizes = [1, 256], strides = [1, 1]} : vector<9x256xf32> to vector<1x256xf32>
    %74 = vector.broadcast %73 : vector<1x256xf32> to vector<12x256xf32>
    %75 = arith.mulf %72, %74 : vector<12x256xf32>
    %76 = vector.extract_strided_slice %20 {offsets = [0, 7], sizes = [12, 1], strides = [1, 1]} : vector<12x9xf32> to vector<12x1xf32>
    %77 = vector.broadcast %76 : vector<12x1xf32> to vector<12x256xf32>
    %78 = arith.mulf %75, %77 : vector<12x256xf32>
    %79 = arith.addf %71, %78 : vector<12x256xf32>
    %c239_i32 = arith.constant 239 : i32
    %80 = tpu.dynamic_rotate %18 by %c239_i32 dim 1 : vector<12x256xf32>, i32 -> vector<12x256xf32>
    %81 = vector.extract_strided_slice %2 {offsets = [8, 0], sizes = [1, 256], strides = [1, 1]} : vector<9x256xf32> to vector<1x256xf32>
    %82 = vector.broadcast %81 : vector<1x256xf32> to vector<12x256xf32>
    %83 = arith.mulf %80, %82 : vector<12x256xf32>
    %84 = vector.extract_strided_slice %20 {offsets = [0, 8], sizes = [12, 1], strides = [1, 1]} : vector<12x9xf32> to vector<12x1xf32>
    %85 = vector.broadcast %84 : vector<12x1xf32> to vector<12x256xf32>
    %86 = arith.mulf %83, %85 : vector<12x256xf32>
    %87 = arith.addf %79, %86 : vector<12x256xf32>
    %88 = vector.broadcast %3 : vector<12x1xf32> to vector<12x256xf32>
    %89 = arith.addf %87, %88 : vector<12x256xf32>
    %90 = arith.negf %89 : vector<12x256xf32>
    %91 = math.exp %90 : vector<12x256xf32>
    %cst_16 = arith.constant 1.000000e+00 : f32
    %92 = vector.broadcast %cst_16 : f32 to vector<12x256xf32>
    %93 = arith.addf %92, %91 : vector<12x256xf32>
    %94 = arith.divf %92, %93 : vector<12x256xf32>
    %95 = arith.mulf %89, %94 : vector<12x256xf32>
    %c1 = arith.constant 1 : index
    %c0_17 = arith.constant 0 : index
    %c0_18 = arith.constant 0 : index
    %96 = vector.load %arg3[%c1, %c0_17, %c0_18] : memref<2x12x12xbf16, #tpu.memory_space<vmem>>, vector<1x12x12xbf16>
    %97 = vector.shape_cast %96 : vector<1x12x12xbf16> to vector<12x12xbf16>
    %98 = arith.truncf %95 : vector<12x256xf32> to vector<12x256xbf16>
    %cst_19 = arith.constant dense<0.000000e+00> : vector<12x256xf32>
    %99 = tpu.matmul %97, %98, %cst_19 {dimension_numbers = #tpu.dot_dimension_numbers<[1], [0], [0], [1], [0, 0, 1, 1], [], []>} : vector<12x12xbf16>, vector<12x256xbf16>, vector<12x256xf32> -> vector<12x256xf32>
    %c1_20 = arith.constant 1 : index
    %c0_21 = arith.constant 0 : index
    %c0_22 = arith.constant 0 : index
    %100 = vector.load %arg4[%c1_20, %c0_21, %c0_22] : memref<2x12x9xf32, #tpu.memory_space<vmem>>, vector<1x12x9xf32>
    %101 = vector.shape_cast %100 : vector<1x12x9xf32> to vector<12x9xf32>
    %c17_i32_23 = arith.constant 17 : i32
    %102 = tpu.dynamic_rotate %99 by %c17_i32_23 dim 1 : vector<12x256xf32>, i32 -> vector<12x256xf32>
    %103 = vector.extract_strided_slice %2 {offsets = [0, 0], sizes = [1, 256], strides = [1, 1]} : vector<9x256xf32> to vector<1x256xf32>
    %104 = vector.broadcast %103 : vector<1x256xf32> to vector<12x256xf32>
    %105 = arith.mulf %102, %104 : vector<12x256xf32>
    %106 = vector.extract_strided_slice %101 {offsets = [0, 0], sizes = [12, 1], strides = [1, 1]} : vector<12x9xf32> to vector<12x1xf32>
    %107 = vector.broadcast %106 : vector<12x1xf32> to vector<12x256xf32>
    %108 = arith.mulf %105, %107 : vector<12x256xf32>
    %c16_i32_24 = arith.constant 16 : i32
    %109 = tpu.dynamic_rotate %99 by %c16_i32_24 dim 1 : vector<12x256xf32>, i32 -> vector<12x256xf32>
    %110 = vector.extract_strided_slice %2 {offsets = [1, 0], sizes = [1, 256], strides = [1, 1]} : vector<9x256xf32> to vector<1x256xf32>
    %111 = vector.broadcast %110 : vector<1x256xf32> to vector<12x256xf32>
    %112 = arith.mulf %109, %111 : vector<12x256xf32>
    %113 = vector.extract_strided_slice %101 {offsets = [0, 1], sizes = [12, 1], strides = [1, 1]} : vector<12x9xf32> to vector<12x1xf32>
    %114 = vector.broadcast %113 : vector<12x1xf32> to vector<12x256xf32>
    %115 = arith.mulf %112, %114 : vector<12x256xf32>
    %116 = arith.addf %108, %115 : vector<12x256xf32>
    %c15_i32_25 = arith.constant 15 : i32
    %117 = tpu.dynamic_rotate %99 by %c15_i32_25 dim 1 : vector<12x256xf32>, i32 -> vector<12x256xf32>
    %118 = vector.extract_strided_slice %2 {offsets = [2, 0], sizes = [1, 256], strides = [1, 1]} : vector<9x256xf32> to vector<1x256xf32>
    %119 = vector.broadcast %118 : vector<1x256xf32> to vector<12x256xf32>
    %120 = arith.mulf %117, %119 : vector<12x256xf32>
    %121 = vector.extract_strided_slice %101 {offsets = [0, 2], sizes = [12, 1], strides = [1, 1]} : vector<12x9xf32> to vector<12x1xf32>
    %122 = vector.broadcast %121 : vector<12x1xf32> to vector<12x256xf32>
    %123 = arith.mulf %120, %122 : vector<12x256xf32>
    %124 = arith.addf %116, %123 : vector<12x256xf32>
    %c1_i32_26 = arith.constant 1 : i32
    %125 = tpu.dynamic_rotate %99 by %c1_i32_26 dim 1 : vector<12x256xf32>, i32 -> vector<12x256xf32>
    %126 = vector.extract_strided_slice %2 {offsets = [3, 0], sizes = [1, 256], strides = [1, 1]} : vector<9x256xf32> to vector<1x256xf32>
    %127 = vector.broadcast %126 : vector<1x256xf32> to vector<12x256xf32>
    %128 = arith.mulf %125, %127 : vector<12x256xf32>
    %129 = vector.extract_strided_slice %101 {offsets = [0, 3], sizes = [12, 1], strides = [1, 1]} : vector<12x9xf32> to vector<12x1xf32>
    %130 = vector.broadcast %129 : vector<12x1xf32> to vector<12x256xf32>
    %131 = arith.mulf %128, %130 : vector<12x256xf32>
    %132 = arith.addf %124, %131 : vector<12x256xf32>
    %133 = vector.extract_strided_slice %101 {offsets = [0, 4], sizes = [12, 1], strides = [1, 1]} : vector<12x9xf32> to vector<12x1xf32>
    %134 = vector.broadcast %133 : vector<12x1xf32> to vector<12x256xf32>
    %135 = arith.mulf %99, %134 : vector<12x256xf32>
    %136 = arith.addf %132, %135 : vector<12x256xf32>
    %c255_i32_27 = arith.constant 255 : i32
    %137 = tpu.dynamic_rotate %99 by %c255_i32_27 dim 1 : vector<12x256xf32>, i32 -> vector<12x256xf32>
    %138 = vector.extract_strided_slice %2 {offsets = [5, 0], sizes = [1, 256], strides = [1, 1]} : vector<9x256xf32> to vector<1x256xf32>
    %139 = vector.broadcast %138 : vector<1x256xf32> to vector<12x256xf32>
    %140 = arith.mulf %137, %139 : vector<12x256xf32>
    %141 = vector.extract_strided_slice %101 {offsets = [0, 5], sizes = [12, 1], strides = [1, 1]} : vector<12x9xf32> to vector<12x1xf32>
    %142 = vector.broadcast %141 : vector<12x1xf32> to vector<12x256xf32>
    %143 = arith.mulf %140, %142 : vector<12x256xf32>
    %144 = arith.addf %136, %143 : vector<12x256xf32>
    %c241_i32_28 = arith.constant 241 : i32
    %145 = tpu.dynamic_rotate %99 by %c241_i32_28 dim 1 : vector<12x256xf32>, i32 -> vector<12x256xf32>
    %146 = vector.extract_strided_slice %2 {offsets = [6, 0], sizes = [1, 256], strides = [1, 1]} : vector<9x256xf32> to vector<1x256xf32>
    %147 = vector.broadcast %146 : vector<1x256xf32> to vector<12x256xf32>
    %148 = arith.mulf %145, %147 : vector<12x256xf32>
    %149 = vector.extract_strided_slice %101 {offsets = [0, 6], sizes = [12, 1], strides = [1, 1]} : vector<12x9xf32> to vector<12x1xf32>
    %150 = vector.broadcast %149 : vector<12x1xf32> to vector<12x256xf32>
    %151 = arith.mulf %148, %150 : vector<12x256xf32>
    %152 = arith.addf %144, %151 : vector<12x256xf32>
    %c240_i32_29 = arith.constant 240 : i32
    %153 = tpu.dynamic_rotate %99 by %c240_i32_29 dim 1 : vector<12x256xf32>, i32 -> vector<12x256xf32>
    %154 = vector.extract_strided_slice %2 {offsets = [7, 0], sizes = [1, 256], strides = [1, 1]} : vector<9x256xf32> to vector<1x256xf32>
    %155 = vector.broadcast %154 : vector<1x256xf32> to vector<12x256xf32>
    %156 = arith.mulf %153, %155 : vector<12x256xf32>
    %157 = vector.extract_strided_slice %101 {offsets = [0, 7], sizes = [12, 1], strides = [1, 1]} : vector<12x9xf32> to vector<12x1xf32>
    %158 = vector.broadcast %157 : vector<12x1xf32> to vector<12x256xf32>
    %159 = arith.mulf %156, %158 : vector<12x256xf32>
    %160 = arith.addf %152, %159 : vector<12x256xf32>
    %c239_i32_30 = arith.constant 239 : i32
    %161 = tpu.dynamic_rotate %99 by %c239_i32_30 dim 1 : vector<12x256xf32>, i32 -> vector<12x256xf32>
    %162 = vector.extract_strided_slice %2 {offsets = [8, 0], sizes = [1, 256], strides = [1, 1]} : vector<9x256xf32> to vector<1x256xf32>
    %163 = vector.broadcast %162 : vector<1x256xf32> to vector<12x256xf32>
    %164 = arith.mulf %161, %163 : vector<12x256xf32>
    %165 = vector.extract_strided_slice %101 {offsets = [0, 8], sizes = [12, 1], strides = [1, 1]} : vector<12x9xf32> to vector<12x1xf32>
    %166 = vector.broadcast %165 : vector<12x1xf32> to vector<12x256xf32>
    %167 = arith.mulf %164, %166 : vector<12x256xf32>
    %168 = arith.addf %160, %167 : vector<12x256xf32>
    %169 = vector.broadcast %3 : vector<12x1xf32> to vector<12x256xf32>
    %170 = arith.addf %168, %169 : vector<12x256xf32>
    %171 = arith.negf %170 : vector<12x256xf32>
    %172 = math.exp %171 : vector<12x256xf32>
    %cst_31 = arith.constant 1.000000e+00 : f32
    %173 = vector.broadcast %cst_31 : f32 to vector<12x256xf32>
    %174 = arith.addf %173, %172 : vector<12x256xf32>
    %175 = arith.divf %173, %174 : vector<12x256xf32>
    %176 = arith.mulf %170, %175 : vector<12x256xf32>
    %177 = arith.addf %176, %14 : vector<12x256xf32>
    %c0_32 = arith.constant 0 : index
    %c0_33 = arith.constant 0 : index
    %178 = vector.load %arg5[%c0_32, %c0_33] : memref<16x12xbf16, #tpu.memory_space<vmem>>, vector<16x12xbf16>
    %179 = arith.truncf %177 : vector<12x256xf32> to vector<12x256xbf16>
    %cst_34 = arith.constant dense<0.000000e+00> : vector<16x256xf32>
    %180 = tpu.matmul %178, %179, %cst_34 {dimension_numbers = #tpu.dot_dimension_numbers<[1], [0], [0], [1], [0, 0, 1, 1], [], []>} : vector<16x12xbf16>, vector<12x256xbf16>, vector<16x256xf32> -> vector<16x256xf32>
    %c0_35 = arith.constant 0 : index
    %c0_36 = arith.constant 0 : index
    %181 = vector.load %arg8[%c0_35, %c0_36] : memref<16x1xf32, #tpu.memory_space<vmem>>, vector<16x1xf32>
    %182 = vector.broadcast %181 : vector<16x1xf32> to vector<16x256xf32>
    %183 = arith.addf %180, %182 : vector<16x256xf32>
    %184 = arith.negf %183 : vector<16x256xf32>
    %185 = math.exp %184 : vector<16x256xf32>
    %cst_37 = arith.constant 1.000000e+00 : f32
    %186 = vector.broadcast %cst_37 : f32 to vector<16x256xf32>
    %187 = arith.addf %186, %185 : vector<16x256xf32>
    %188 = arith.divf %186, %187 : vector<16x256xf32>
    %189 = arith.mulf %183, %188 : vector<16x256xf32>
    %190 = arith.addf %189, %1 : vector<16x256xf32>
    %c0_38 = arith.constant 0 : index
    %c0_39 = arith.constant 0 : index
    %c0_40 = arith.constant 0 : index
    %191 = vector.load %arg9[%c0_38, %c0_39, %c0_40] : memref<1x16x256xf32, #tpu.memory_space<vmem>>, vector<1x16x256xf32>
    %192 = vector.shape_cast %191 : vector<1x16x256xf32> to vector<16x256xf32>
    %193 = vector.shape_cast %190 : vector<16x256xf32> to vector<1x16x256xf32>
    tpu.vector_store %arg9[%c0_38, %c0_39, %c0_40], %193 {strides = array<i32>} : memref<1x16x256xf32, #tpu.memory_space<vmem>>, vector<1x16x256xf32>,
    return
  }
  func.func @transform_0(%arg0: i32) -> (i32, i32, i32) {
    %c0_i32 = arith.constant 0 : i32
    %c0_i32_0 = arith.constant 0 : i32
    %c0_i32_1 = arith.constant 0 : i32
    return %arg0, %c0_i32, %c0_i32_0 : i32, i32, i32
  }
  func.func @transform_1(%arg0: i32) -> (i32, i32) {
    %c0_i32 = arith.constant 0 : i32
    %c0_i32_0 = arith.constant 0 : i32
    %c0_i32_1 = arith.constant 0 : i32
    return %c0_i32, %c0_i32_0 : i32, i32
  }
  func.func @transform_2(%arg0: i32) -> (i32, i32, i32) {
    %c0_i32 = arith.constant 0 : i32
    %c0_i32_0 = arith.constant 0 : i32
    %c0_i32_1 = arith.constant 0 : i32
    %c0_i32_2 = arith.constant 0 : i32
    return %c0_i32, %c0_i32_0, %c0_i32_1 : i32, i32, i32
  }
  func.func @transform_3(%arg0: i32) -> (i32, i32, i32) {
    %c0_i32 = arith.constant 0 : i32
    %c0_i32_0 = arith.constant 0 : i32
    %c0_i32_1 = arith.constant 0 : i32
    %c0_i32_2 = arith.constant 0 : i32
    return %c0_i32, %c0_i32_0, %c0_i32_1 : i32, i32, i32
  }
  func.func @transform_4(%arg0: i32) -> (i32, i32) {
    %c0_i32 = arith.constant 0 : i32
    %c0_i32_0 = arith.constant 0 : i32
    %c0_i32_1 = arith.constant 0 : i32
    return %c0_i32, %c0_i32_0 : i32, i32
  }
  func.func @transform_5(%arg0: i32) -> (i32, i32) {
    %c0_i32 = arith.constant 0 : i32
    %c0_i32_0 = arith.constant 0 : i32
    %c0_i32_1 = arith.constant 0 : i32
    return %c0_i32, %c0_i32_0 : i32, i32
  }
  func.func @transform_6(%arg0: i32) -> (i32, i32) {
    %c0_i32 = arith.constant 0 : i32
    %c0_i32_0 = arith.constant 0 : i32
    %c0_i32_1 = arith.constant 0 : i32
    return %c0_i32, %c0_i32_0 : i32, i32
  }
  func.func @transform_7(%arg0: i32) -> (i32, i32) {
    %c0_i32 = arith.constant 0 : i32
    %c0_i32_0 = arith.constant 0 : i32
    %c0_i32_1 = arith.constant 0 : i32
    return %c0_i32, %c0_i32_0 : i32, i32
  }
  func.func @transform_8(%arg0: i32) -> (i32, i32, i32) {
    %c0_i32 = arith.constant 0 : i32
    %c0_i32_0 = arith.constant 0 : i32
    %c0_i32_1 = arith.constant 0 : i32
    return %arg0, %c0_i32, %c0_i32_0 : i32, i32, i32
  }
}

</mosaic_0001>

<llo_original>
// kernel: pdrre_block_forward.1
$region0: #{pdrre_block_forward.1}
  #allocation0 [shape = 'u32[]', space=smem, size = 0x4, offset = 0x4, fixed_abs, tag = 'smem constant byte address 0x4 - core index']
  #allocation1 [shape = 'u32[72,128]{1,0:T(1,128)}', space=vmem, size = 0x9000, scoped, tag = 'internal scratch']
  %s0 = inlined_call_operand.vmem [shape: f32[2,16,256], index: 0, kind: input, shape index: {}]
  %s1 = inlined_call_operand.vmem [shape: bf16[12,16], index: 1, kind: input, shape index: {}]
  %s2 = inlined_call_operand.vmem [shape: bf16[2,12,12], index: 2, kind: input, shape index: {}]
  %s3 = inlined_call_operand.vmem [shape: f32[2,12,9], index: 3, kind: input, shape index: {}]
  %s4 = inlined_call_operand.vmem [shape: bf16[16,12], index: 4, kind: input, shape index: {}]
  %s5 = inlined_call_operand.vmem [shape: f32[9,256], index: 5, kind: input, shape index: {}]
  %s6 = inlined_call_operand.vmem [shape: f32[12,1], index: 6, kind: input, shape index: {}]
  %s7 = inlined_call_operand.vmem [shape: f32[16,1], index: 7, kind: input, shape index: {}]
  %s8 = inlined_call_operand.vmem [shape: f32[2,16,256], index: 8, kind: output, shape index: {}]
  %s9 = sld [smem:[#allocation0]]
  $region65: #{pdrre_block_forward.1} parent=0
    _
  %s11 = ssub.s32 1, %s9
  %s12 = scalar_select 0, %s11, %s9
  loop: start=0, step=1, limit=4
  $region2: #{pdrre_block_forward.1} parent=0 // loop_pre_header
    _
  $region3: #{pdrre_block_forward.1} parent=0 // loop_header
    %s14 = sphi 0, %s18
    %p15 = scmp.ge.s32.totalorder %s14, 4
    %s24 = sphi 0, %s26
    %s27 = sphi 0, %s24
    %s28 = sphi 0, %s27
    %s44 = sphi 0, %s28
    %s48 = sphi 0, %s48
    %s50 = sphi 0, %s48
    %s51 = sphi 0, %s50
    %s65 = sphi 0, %s51
    %s69 = sphi 0, %s69
    %s71 = sphi 0, %s69
    %s72 = sphi 0, %s71
    %s86 = sphi 0, %s72
    %s90 = sphi 0, %s90
    %s92 = sphi 0, %s90
    %s93 = sphi 0, %s92
    %s107 = sphi 0, %s93
    %s111 = sphi 0, %s111
    %s113 = sphi 0, %s111
    %s114 = sphi 0, %s113
    %s128 = sphi 0, %s114
    %s132 = sphi 0, %s132
    %s134 = sphi 0, %s132
    %s135 = sphi 0, %s134
    %s149 = sphi 0, %s135
    %s153 = sphi 0, %s153
    %s155 = sphi 0, %s153
    %s156 = sphi 0, %s155
    %s170 = sphi 0, %s156
    %s174 = sphi 0, %s174
    %s176 = sphi 0, %s174
    %s177 = sphi 0, %s176
    %s191 = sphi 0, %s177
    %s197 = sphi 0, %s199
    %s200 = sphi 0, %s197
    %s201 = sphi 0, %s200
    %s217 = sphi 0, %s201
  $region4: #{pdrre_block_forward.1} parent=0 // loop_header_branch
    %17 = sbr.rel (%p15) target = $region8
  $region5: #{pdrre_block_forward.1} parent=0 // loop_body
    %s19 = ssub.s32 %s14, 1
    %s20 = ssub.s32 %s14, 2
    %s21 = sadd.s32 %s14, 1
    %s22 = ssub.s32 %s14, %s21
    %p23 = scmp.eq.s32.totalorder %s22, 0
    %s25 = sadd.s32 %s24, 1
    %s26 = scalar_select %p23, %s24, %s25
    %p29 = pneg %p23
    %p30 = scmp.eq.s32.totalorder %s14, 1
    %p31 = por %p29, %p30
    %p32 = scmp.ne.s32.totalorder %s24, %s27
    %p33 = scmp.eq.s32.totalorder %s14, 0
    %p34 = por %p32, %p33
    %p35 = scmp.ne.s32.totalorder %s24, %s27
    %p36 = scmp.eq.s32.totalorder %s19, 1
    %p37 = por %p35, %p36
    %p38 = scmp.ne.s32.totalorder %s27, %s28
    %p39 = scmp.eq.s32.totalorder %s19, 0
    %p40 = por %p38, %p39
    %p41 = scmp.ne.s32.totalorder %s27, %s28
    %p42 = scmp.eq.s32.totalorder %s20, 1
    %p43 = por %p41, %p42
    %p45 = scmp.ne.s32.totalorder %s28, %s44
    %p46 = scmp.eq.s32.totalorder %s20, 0
    %p47 = por %p45, %p46
    %s49 = sadd.s32 %s48, 1
    %p52 = scmp.eq.s32.totalorder %s14, 1
    %p53 = scmp.ne.s32.totalorder %s48, %s50
    %p54 = scmp.eq.s32.totalorder %s14, 0
    %p55 = por %p53, %p54
    %p56 = scmp.ne.s32.totalorder %s48, %s50
    %p57 = scmp.eq.s32.totalorder %s19, 1
    %p58 = por %p56, %p57
    %p59 = scmp.ne.s32.totalorder %s50, %s51
    %p60 = scmp.eq.s32.totalorder %s19, 0
    %p61 = por %p59, %p60
    %p62 = scmp.ne.s32.totalorder %s50, %s51
    %p63 = scmp.eq.s32.totalorder %s20, 1
    %p64 = por %p62, %p63
    %p66 = scmp.ne.s32.totalorder %s51, %s65
    %p67 = scmp.eq.s32.totalorder %s20, 0
    %p68 = por %p66, %p67
    %s70 = sadd.s32 %s69, 1
    %p73 = scmp.eq.s32.totalorder %s14, 1
    %p74 = scmp.ne.s32.totalorder %s69, %s71
    %p75 = scmp.eq.s32.totalorder %s14, 0
    %p76 = por %p74, %p75
    %p77 = scmp.ne.s32.totalorder %s69, %s71
    %p78 = scmp.eq.s32.totalorder %s19, 1
    %p79 = por %p77, %p78
    %p80 = scmp.ne.s32.totalorder %s71, %s72
    %p81 = scmp.eq.s32.totalorder %s19, 0
    %p82 = por %p80, %p81
    %p83 = scmp.ne.s32.totalorder %s71, %s72
    %p84 = scmp.eq.s32.totalorder %s20, 1
    %p85 = por %p83, %p84
    %p87 = scmp.ne.s32.totalorder %s72, %s86
    %p88 = scmp.eq.s32.totalorder %s20, 0
    %p89 = por %p87, %p88
    %s91 = sadd.s32 %s90, 1
    %p94 = scmp.eq.s32.totalorder %s14, 1
    %p95 = scmp.ne.s32.totalorder %s90, %s92
    %p96 = scmp.eq.s32.totalorder %s14, 0
    %p97 = por %p95, %p96
    %p98 = scmp.ne.s32.totalorder %s90, %s92
    %p99 = scmp.eq.s32.totalorder %s19, 1
    %p100 = por %p98, %p99
    %p101 = scmp.ne.s32.totalorder %s92, %s93
    %p102 = scmp.eq.s32.totalorder %s19, 0
    %p103 = por %p101, %p102
    %p104 = scmp.ne.s32.totalorder %s92, %s93
    %p105 = scmp.eq.s32.totalorder %s20, 1
    %p106 = por %p104, %p105
    %p108 = scmp.ne.s32.totalorder %s93, %s107
    %p109 = scmp.eq.s32.totalorder %s20, 0
    %p110 = por %p108, %p109
    %s112 = sadd.s32 %s111, 1
    %p115 = scmp.eq.s32.totalorder %s14, 1
    %p116 = scmp.ne.s32.totalorder %s111, %s113
    %p117 = scmp.eq.s32.totalorder %s14, 0
    %p118 = por %p116, %p117
    %p119 = scmp.ne.s32.totalorder %s111, %s113
    %p120 = scmp.eq.s32.totalorder %s19, 1
    %p121 = por %p119, %p120
    %p122 = scmp.ne.s32.totalorder %s113, %s114
    %p123 = scmp.eq.s32.totalorder %s19, 0
    %p124 = por %p122, %p123
    %p125 = scmp.ne.s32.totalorder %s113, %s114
    %p126 = scmp.eq.s32.totalorder %s20, 1
    %p127 = por %p125, %p126
    %p129 = scmp.ne.s32.totalorder %s114, %s128
    %p130 = scmp.eq.s32.totalorder %s20, 0
    %p131 = por %p129, %p130
    %s133 = sadd.s32 %s132, 1
    %p136 = scmp.eq.s32.totalorder %s14, 1
    %p137 = scmp.ne.s32.totalorder %s132, %s134
    %p138 = scmp.eq.s32.totalorder %s14, 0
    %p139 = por %p137, %p138
    %p140 = scmp.ne.s32.totalorder %s132, %s134
    %p141 = scmp.eq.s32.totalorder %s19, 1
    %p142 = por %p140, %p141
    %p143 = scmp.ne.s32.totalorder %s134, %s135
    %p144 = scmp.eq.s32.totalorder %s19, 0
    %p145 = por %p143, %p144
    %p146 = scmp.ne.s32.totalorder %s134, %s135
    %p147 = scmp.eq.s32.totalorder %s20, 1
    %p148 = por %p146, %p147
    %p150 = scmp.ne.s32.totalorder %s135, %s149
    %p151 = scmp.eq.s32.totalorder %s20, 0
    %p152 = por %p150, %p151
    %s154 = sadd.s32 %s153, 1
    %p157 = scmp.eq.s32.totalorder %s14, 1
    %p158 = scmp.ne.s32.totalorder %s153, %s155
    %p159 = scmp.eq.s32.totalorder %s14, 0
    %p160 = por %p158, %p159
    %p161 = scmp.ne.s32.totalorder %s153, %s155
    %p162 = scmp.eq.s32.totalorder %s19, 1
    %p163 = por %p161, %p162
    %p164 = scmp.ne.s32.totalorder %s155, %s156
    %p165 = scmp.eq.s32.totalorder %s19, 0
    %p166 = por %p164, %p165
    %p167 = scmp.ne.s32.totalorder %s155, %s156
    %p168 = scmp.eq.s32.totalorder %s20, 1
    %p169 = por %p167, %p168
    %p171 = scmp.ne.s32.totalorder %s156, %s170
    %p172 = scmp.eq.s32.totalorder %s20, 0
    %p173 = por %p171, %p172
    %s175 = sadd.s32 %s174, 1
    %p178 = scmp.eq.s32.totalorder %s14, 1
    %p179 = scmp.ne.s32.totalorder %s174, %s176
    %p180 = scmp.eq.s32.totalorder %s14, 0
    %p181 = por %p179, %p180
    %p182 = scmp.ne.s32.totalorder %s174, %s176
    %p183 = scmp.eq.s32.totalorder %s19, 1
    %p184 = por %p182, %p183
    %p185 = scmp.ne.s32.totalorder %s176, %s177
    %p186 = scmp.eq.s32.totalorder %s19, 0
    %p187 = por %p185, %p186
    %p188 = scmp.ne.s32.totalorder %s176, %s177
    %p189 = scmp.eq.s32.totalorder %s20, 1
    %p190 = por %p188, %p189
    %p192 = scmp.ne.s32.totalorder %s177, %s191
    %p193 = scmp.eq.s32.totalorder %s20, 0
    %p194 = por %p192, %p193
    %s195 = ssub.s32 %s14, %s21
    %p196 = scmp.eq.s32.totalorder %s195, 0
    %s198 = sadd.s32 %s197, 1
    %s199 = scalar_select %p196, %s197, %s198
    %p202 = pneg %p196
    %p203 = scmp.eq.s32.totalorder %s14, 1
    %p204 = por %p202, %p203
    %p205 = scmp.ne.s32.totalorder %s197, %s200
    %p206 = scmp.eq.s32.totalorder %s14, 0
    %p207 = por %p205, %p206
    %p208 = scmp.ne.s32.totalorder %s197, %s200
    %p209 = scmp.eq.s32.totalorder %s19, 1
    %p210 = por %p208, %p209
    %p211 = scmp.ne.s32.totalorder %s200, %s201
    %p212 = scmp.eq.s32.totalorder %s19, 0
    %p213 = por %p211, %p212
    %p214 = scmp.ne.s32.totalorder %s200, %s201
    %p215 = scmp.eq.s32.totalorder %s20, 1
    %p216 = por %p214, %p215
    %p218 = scmp.ne.s32.totalorder %s201, %s217
    %p219 = scmp.eq.s32.totalorder %s20, 0
    %p220 = por %p218, %p219
    %p221 = scmp.le.s32.totalorder 1, %s14
    %p222 = scmp.lt.s32.totalorder %s14, 3
    %p223 = pnand %p221, %p222
    %p224 = pneg %p223
    // Predicated region
    $region9: #{pdrre_block_forward.1} parent=5 // pred_check
      _
    $region10: #{pdrre_block_forward.1} parent=5 // pred_check_branch
      %226 = sbr.rel (%p223) target = $region12
    $region11: #{pdrre_block_forward.1} parent=5 // pred_region
      %s227 = ssub.s32 %s14, 1
      // Predicated region
      $region13: #{pdrre_block_forward.1} parent=11 // pred_check
        %p228 = pneg %p61
      $region14: #{pdrre_block_forward.1} parent=11 // pred_check_branch
        %230 = sbr.rel (%p228) target = $region16
      $region15: #{pdrre_block_forward.1} parent=11 // pred_region
        _
      $region16: #{pdrre_block_forward.1} parent=11 // pred_fallthru
        _
      // Predicated region
      $region17: #{pdrre_block_forward.1} parent=11 // pred_check
        %p231 = pneg %p82
      $region18: #{pdrre_block_forward.1} parent=11 // pred_check_branch
        %233 = sbr.rel (%p231) target = $region20
      $region19: #{pdrre_block_forward.1} parent=11 // pred_region
        _
      $region20: #{pdrre_block_forward.1} parent=11 // pred_fallthru
        _
      // Predicated region
      $region21: #{pdrre_block_forward.1} parent=11 // pred_check
        %p234 = pneg %p103
      $region22: #{pdrre_block_forward.1} parent=11 // pred_check_branch
        %236 = sbr.rel (%p234) target = $region24
      $region23: #{pdrre_block_forward.1} parent=11 // pred_region
        _
      $region24: #{pdrre_block_forward.1} parent=11 // pred_fallthru
        _
      // Predicated region
      $region25: #{pdrre_block_forward.1} parent=11 // pred_check
        %p237 = pneg %p124
      $region26: #{pdrre_block_forward.1} parent=11 // pred_check_branch
        %239 = sbr.rel (%p237) target = $region28
      $region27: #{pdrre_block_forward.1} parent=11 // pred_region
        _
      $region28: #{pdrre_block_forward.1} parent=11 // pred_fallthru
        _
      // Predicated region
      $region29: #{pdrre_block_forward.1} parent=11 // pred_check
        %p240 = pneg %p145
      $region30: #{pdrre_block_forward.1} parent=11 // pred_check_branch
        %242 = sbr.rel (%p240) target = $region32
      $region31: #{pdrre_block_forward.1} parent=11 // pred_region
        _
      $region32: #{pdrre_block_forward.1} parent=11 // pred_fallthru
        _
      // Predicated region
      $region33: #{pdrre_block_forward.1} parent=11 // pred_check
        %p243 = pneg %p166
      $region34: #{pdrre_block_forward.1} parent=11 // pred_check_branch
        %245 = sbr.rel (%p243) target = $region36
      $region35: #{pdrre_block_forward.1} parent=11 // pred_region
        _
      $region36: #{pdrre_block_forward.1} parent=11 // pred_fallthru
        _
      // Predicated region
      $region37: #{pdrre_block_forward.1} parent=11 // pred_check
        %p246 = pneg %p187
      $region38: #{pdrre_block_forward.1} parent=11 // pred_check_branch
        %248 = sbr.rel (%p246) target = $region40
      $region39: #{pdrre_block_forward.1} parent=11 // pred_region
        _
      $region40: #{pdrre_block_forward.1} parent=11 // pred_fallthru
        _
    $region12: #{pdrre_block_forward.1} parent=5 // pred_fallthru
      _
    %p249 = scmp.lt.s32.totalorder %s14, 2
    // Predicated region
    $region41: #{pdrre_block_forward.1} parent=5 // pred_check
      %p250 = pneg %p249
    $region42: #{pdrre_block_forward.1} parent=5 // pred_check_branch
      %252 = sbr.rel (%p250) target = $region44
    $region43: #{pdrre_block_forward.1} parent=5 // pred_region
      // Predicated region
      $region45: #{pdrre_block_forward.1} parent=43 // pred_check
        %p253 = pneg %p34
      $region46: #{pdrre_block_forward.1} parent=43 // pred_check_branch
        %255 = sbr.rel (%p253) target = $region48
      $region47: #{pdrre_block_forward.1} parent=43 // pred_region
        %p256 = scmp.lt.s32.totalorder %s14, 1
        %s257 = scalar_select %p256, %s14, 1
        %s258 = smul.addr %s257, 4
        %s259 = smul.addr %s258, 8
        %s260 = scalar_lea.vmem %s0, %s259
      $region48: #{pdrre_block_forward.1} parent=43 // pred_fallthru
        _
    $region44: #{pdrre_block_forward.1} parent=5 // pred_fallthru
      _
    %p261 = scmp.le.s32.totalorder 1, %s14
    %p262 = scmp.lt.s32.totalorder %s14, 3
    %p263 = pnand %p261, %p262
    %p264 = pneg %p263
    // Predicated region
    $region49: #{pdrre_block_forward.1} parent=5 // pred_check
      _
    $region50: #{pdrre_block_forward.1} parent=5 // pred_check_branch
      %266 = sbr.rel (%p263) target = $region52
    $region51: #{pdrre_block_forward.1} parent=5 // pred_region
      %s267 = ssub.s32 %s14, 1
      %p268 = scmp.lt.s32.totalorder %s19, 1
      %s269 = scalar_select %p268, %s19, 1
      %s270 = smul.addr %s269, 4
      %s271 = smul.addr %s270, 8
      %s272 = scalar_lea.vmem %s0, %s271
      %p273 = pneg %p40
      %p274 = pneg %p37
      %p275 = pneg %p61
      %p276 = pneg %p58
      %p277 = pneg %p82
      %p278 = pneg %p79
      %p279 = pneg %p103
      %p280 = pneg %p100
      %p281 = pneg %p124
      %p282 = pneg %p121
      %p283 = pneg %p145
      %p284 = pneg %p142
      %p285 = pneg %p166
      %p286 = pneg %p163
      %p287 = pneg %p187
      %p288 = pneg %p184
      %p289 = pneg %p213
      %p290 = pneg %p210
      %p291 = scmp.lt.s32.totalorder %s19, 1
      %s292 = scalar_select %p291, %s19, 1
      %s293 = smul.addr %s292, 4
      %s294 = smul.addr %s293, 8
      %s295 = scalar_lea.vmem %s8, %s294
      %p296 = scmp.lt.s32.totalorder %s19, 1
      %s297 = scalar_select %p296, %s19, 1
      %s298 = smul.addr %s297, 4
      %s299 = smul.addr %s298, 8
      %s300 = scalar_lea.vmem %s0, %s299
      %p301 = scmp.lt.s32.totalorder %s19, 1
      %s302 = scalar_select %p301, %s19, 1
      %s303 = smul.addr %s302, 4
      %s304 = smul.addr %s303, 8
      %s305 = scalar_lea.vmem %s8, %s304
      %v307 = vld [vmem:[%s300] sm:$0xff]
      %v308 = vld [vmem:[%s300 + $0x8] sm:$0xff]
      %v309 = vld [vmem:[%s300 + $0x10] sm:$0xff]
      %v310 = vld [vmem:[%s300 + $0x18] sm:$0xff]
      %v311 = vld [vmem:[%s5] sm:$0xff]
      %v312 = vld [vmem:[%s5 + $0x8] sm:$0xff]
      %v313 = vld [vmem:[%s5 + $0x10] sm:$0x1]
      %v314 = vld [vmem:[%s5 + $0x18] sm:$0x1]
      %v315 = vld [vmem:[%s6] sm:$0xff]
      %v316 = vld [vmem:[%s6 + $0x8] sm:$0xf]
      %v317 = vld [vmem:[%s1] sm:$0xf]
      %v318 = vld [vmem:[%s1 + $0x4] sm:$0x3]
      %v319 = vpack.c.bf16 %v309, %v307
      %v320 = vpack.c.bf16 %v310, %v308
      %322 = vset.pattern.permute.xlu0 0
      %323 = vperm.xlu0 %322, %v315
      %v324 = vpop.permute.xlu0 %323
      %327 = vset.pattern.permute.xlu0 0
      %328 = vperm.xlu0 %327, %v316
      %v329 = vpop.permute.xlu0 %328
      %v333 = vunpack.c.l.b16 %v317
      %v334 = vunpack.c.l.b16 %v318
      %v335 = vpack.c.b16 %v334, %v333
      %vm336 = vcmask 130048
      %v338 = vsel %vm336, %v335, 0
      %340 = vmatpush.bf16.msra.mxu0 0
      %341 = vmatpush.bf16.msra.mxu0 0
      %342 = vmatpush.bf16.msra.mxu0 0
      %343 = vmatpush.bf16.msra.mxu0 0
      %344 = vmatpush.bf16.msra.mxu0 0
      %345 = vmatpush.bf16.msra.mxu0 0
      %346 = vmatpush.bf16.msra.mxu0 0
      %347 = vmatpush.bf16.msra.mxu0 %v319
      %348 = vmatmul.bf16.gmra.mxu0 %v338
      %v349 = vpop.f32.mrf.mxu0
      %v350 = vadd.f32 %v324, %v349
      %v351 = vpop.f32.mrf.mxu0
      %v352 = vadd.f32 %v329, %v351
      %353 = vdwg.mxu0
      %354 = vmatpush.bf16.msra.mxu0 0
      %355 = vmatpush.bf16.msra.mxu0 0
      %356 = vmatpush.bf16.msra.mxu0 0
      %357 = vmatpush.bf16.msra.mxu0 0
      %358 = vmatpush.bf16.msra.mxu0 0
      %359 = vmatpush.bf16.msra.mxu0 0
      %360 = vmatpush.bf16.msra.mxu0 0
      %361 = vmatpush.bf16.msra.mxu0 %v320
      %362 = vmatmul.bf16.gmra.mxu0 %v338
      %v363 = vpop.f32.mrf.mxu0
      %v364 = vadd.f32 %v324, %v363
      %v365 = vpop.f32.mrf.mxu0
      %v366 = vadd.f32 %v329, %v365
      %367 = vdwg.mxu0
      %v368 = vxor.u32 %v350, 2147483648
      %v369 = vxor.u32 %v364, 2147483648
      %v370 = vxor.u32 %v352, 2147483648
      %v371 = vxor.u32 %v366, 2147483648
      %v372 = vmul.f32 %v368, 1.442695
      %v373 = vpow.pop %v372
      %v374 = vmul.f32 %v369, 1.442695
      %v375 = vpow.pop %v374
      %v376 = vmul.f32 %v370, 1.442695
      %v377 = vpow.pop %v376
      %v378 = vmul.f32 %v371, 1.442695
      %v379 = vpow.pop %v378
      %v380 = vadd.f32 %v373, 1.0
      %v381 = vadd.f32 %v375, 1.0
      %v382 = vadd.f32 %v377, 1.0
      %v383 = vadd.f32 %v379, 1.0
      %v384 = vrcp.pop %v380
      %v385 = vmul.f32 %v380, %v384
      %v386 = vsub.f32 1.0, %v385
      %v387 = vmul.f32 %v384, %v386
      %v388 = vadd.f32 %v384, %v387
      %vm389 = vweird.f32 %v380
      %vm390 = vweird.f32 %v384
      %vm391 = vmor %vm389, %vm390
      %v392 = vsel %vm391, %v384, %v388
      %v393 = vand.u32 2147483647, %v380
      %vm394 = vcmp.eq.f32.partialorder %v393, 8.507059e+37
      %v395 = vand.u32 %v380, 2147483648
      %v396 = vor.u32 1.1754944e-38, %v395
      %v397 = vsel %vm394, %v396, %v392
      %v398 = vmul.f32 1.0, %v397
      %v399 = vrcp.pop %v381
      %v400 = vmul.f32 %v381, %v399
      %v401 = vsub.f32 1.0, %v400
      %v402 = vmul.f32 %v399, %v401
      %v403 = vadd.f32 %v399, %v402
      %vm404 = vweird.f32 %v381
      %vm405 = vweird.f32 %v399
      %vm406 = vmor %vm404, %vm405
      %v407 = vsel %vm406, %v399, %v403
      %v408 = vand.u32 2147483647, %v381
      %vm409 = vcmp.eq.f32.partialorder %v408, 8.507059e+37
      %v410 = vand.u32 %v381, 2147483648
      %v411 = vor.u32 1.1754944e-38, %v410
      %v412 = vsel %vm409, %v411, %v407
      %v413 = vmul.f32 1.0, %v412
      %v414 = vrcp.pop %v382
      %v415 = vmul.f32 %v382, %v414
      %v416 = vsub.f32 1.0, %v415
      %v417 = vmul.f32 %v414, %v416
      %v418 = vadd.f32 %v414, %v417
      %vm419 = vweird.f32 %v382
      %vm420 = vweird.f32 %v414
      %vm421 = vmor %vm419, %vm420
      %v422 = vsel %vm421, %v414, %v418
      %v423 = vand.u32 2147483647, %v382
      %vm424 = vcmp.eq.f32.partialorder %v423, 8.507059e+37
      %v425 = vand.u32 %v382, 2147483648
      %v426 = vor.u32 1.1754944e-38, %v425
      %v427 = vsel %vm424, %v426, %v422
      %v428 = vmul.f32 1.0, %v427
      %v429 = vrcp.pop %v383
      %v430 = vmul.f32 %v383, %v429
      %v431 = vsub.f32 1.0, %v430
      %v432 = vmul.f32 %v429, %v431
      %v433 = vadd.f32 %v429, %v432
      %vm434 = vweird.f32 %v383
      %vm435 = vweird.f32 %v429
      %vm436 = vmor %vm434, %vm435
      %v437 = vsel %vm436, %v429, %v433
      %v438 = vand.u32 2147483647, %v383
      %vm439 = vcmp.eq.f32.partialorder %v438, 8.507059e+37
      %v440 = vand.u32 %v383, 2147483648
      %v441 = vor.u32 1.1754944e-38, %v440
      %v442 = vsel %vm439, %v441, %v437
      %v443 = vmul.f32 1.0, %v442
      %v444 = vmul.f32 %v350, %v398
      %v445 = vmul.f32 %v364, %v413
      %v446 = vmul.f32 %v352, %v428
      %v447 = vmul.f32 %v366, %v443
      %v448 = vld [vmem:[%s2] sm:$0xf]
      %v449 = vld [vmem:[%s2 + $0x4] sm:$0x3]
      %v450 = vpack.c.bf16 %v446, %v444
      %v451 = vpack.c.bf16 %v447, %v445
      %v454 = vunpack.c.l.b16 %v448
      %v455 = vunpack.c.l.b16 %v449
      %v456 = vpack.c.b16 %v455, %v454
      %vm457 = vcmask 97280
      %v459 = vsel %vm457, %v456, 0
      %vm461 = vcmask 1045504
      %v463 = vsel %vm461, %v450, 0
      %v466 = vsel %vm461, %v451, 0
      %468 = vmatpush.bf16.msra.mxu0 0
      %469 = vmatpush.bf16.msra.mxu0 0
      %470 = vmatpush.bf16.msra.mxu0 0
      %471 = vmatpush.bf16.msra.mxu0 0
      %472 = vmatpush.bf16.msra.mxu0 0
      %473 = vmatpush.bf16.msra.mxu0 0
      %474 = vmatpush.bf16.msra.mxu0 0
      %475 = vmatpush.bf16.msra.mxu0 %v463
      %476 = vmatmul.bf16.gmra.mxu0 %v459
      %v477 = vpop.f32.mrf.mxu0
      %v478 = vadd.f32 0.0, %v477
      %v479 = vpop.f32.mrf.mxu0
      %v480 = vadd.f32 0.0, %v479
      %481 = vdwg.mxu0
      %482 = vmatpush.bf16.msra.mxu0 0
      %483 = vmatpush.bf16.msra.mxu0 0
      %484 = vmatpush.bf16.msra.mxu0 0
      %485 = vmatpush.bf16.msra.mxu0 0
      %486 = vmatpush.bf16.msra.mxu0 0
      %487 = vmatpush.bf16.msra.mxu0 0
      %488 = vmatpush.bf16.msra.mxu0 0
      %489 = vmatpush.bf16.msra.mxu0 %v466
      %490 = vmatmul.bf16.gmra.mxu0 %v459
      %v491 = vpop.f32.mrf.mxu0
      %v492 = vadd.f32 0.0, %v491
      %v493 = vpop.f32.mrf.mxu0
      %v494 = vadd.f32 0.0, %v493
      %495 = vdwg.mxu0
      %v496 = vld [vmem:[%s3] sm:$0xff]
      %v497 = vld [vmem:[%s3 + $0x8] sm:$0xf]
      %498 = vrot.lane.b32.xlu0 %v478, 17
      %v499 = vpop.permute.xlu0 %498
      %500 = vrot.lane.b32.xlu0 %v480, 17
      %v501 = vpop.permute.xlu0 %500
      %502 = vrot.lane.b32.xlu0 %v492, 17
      %v503 = vpop.permute.xlu0 %502
      %504 = vrot.lane.b32.xlu0 %v494, 17
      %v505 = vpop.permute.xlu0 %504
      %v506 = vlaneseq
      %v507 = vand.u32 %v506, 127
      %vm508 = vcmp.lt.s32.totalorder %v507, 17
      %v509 = vsel %vm508, %v499, %v503
      %v510 = vsel %vm508, %v501, %v505
      %v511 = vsel %vm508, %v503, %v499
      %v512 = vsel %vm508, %v505, %v501
      %v513 = vperm.slane %v311, 0
      %v514 = vperm.slane %v312, 0
      %v515 = vmul.f32 %v511, %v513
      %v516 = vmul.f32 %v509, %v514
      %v517 = vmul.f32 %v512, %v513
      %v518 = vmul.f32 %v510, %v514
      %520 = vset.pattern.permute.xlu0 0
      %521 = vperm.xlu0 %520, %v496
      %v522 = vpop.permute.xlu0 %521
      %525 = vset.pattern.permute.xlu0 0
      %526 = vperm.xlu0 %525, %v497
      %v527 = vpop.permute.xlu0 %526
      %v529 = vmul.f32 %v515, %v522
      %v530 = vmul.f32 %v516, %v522
      %v531 = vmul.f32 %v517, %v527
      %v532 = vmul.f32 %v518, %v527
      %533 = vrot.lane.b32.xlu0 %v478, 16
      %v534 = vpop.permute.xlu0 %533
      %535 = vrot.lane.b32.xlu0 %v480, 16
      %v536 = vpop.permute.xlu0 %535
      %537 = vrot.lane.b32.xlu0 %v492, 16
      %v538 = vpop.permute.xlu0 %537
      %539 = vrot.lane.b32.xlu0 %v494, 16
      %v540 = vpop.permute.xlu0 %539
      %vm541 = vcmp.lt.s32.totalorder %v507, 16
      %v542 = vsel %vm541, %v534, %v538
      %v543 = vsel %vm541, %v536, %v540
      %v544 = vsel %vm541, %v538, %v534
      %v545 = vsel %vm541, %v540, %v536
      %v546 = vperm.slane %v311, 1
      %v547 = vperm.slane %v312, 1
      %v548 = vmul.f32 %v544, %v546
      %v549 = vmul.f32 %v542, %v547
      %v550 = vmul.f32 %v545, %v546
      %v551 = vmul.f32 %v543, %v547
      %552 = vset.pattern.permute.xlu0 1
      %553 = vperm.xlu0 %552, %v496
      %v554 = vpop.permute.xlu0 %553
      %556 = vset.pattern.permute.xlu0 1
      %557 = vperm.xlu0 %556, %v497
      %v558 = vpop.permute.xlu0 %557
      %v560 = vmul.f32 %v548, %v554
      %v561 = vmul.f32 %v549, %v554
      %v562 = vmul.f32 %v550, %v558
      %v563 = vmul.f32 %v551, %v558
      %v564 = vadd.f32 %v529, %v560
      %v565 = vadd.f32 %v530, %v561
      %v566 = vadd.f32 %v531, %v562
      %v567 = vadd.f32 %v532, %v563
      %568 = vrot.lane.b32.xlu0 %v478, 15
      %v569 = vpop.permute.xlu0 %568
      %570 = vrot.lane.b32.xlu0 %v480, 15
      %v571 = vpop.permute.xlu0 %570
      %572 = vrot.lane.b32.xlu0 %v492, 15
      %v573 = vpop.permute.xlu0 %572
      %574 = vrot.lane.b32.xlu0 %v494, 15
      %v575 = vpop.permute.xlu0 %574
      %vm576 = vcmp.lt.s32.totalorder %v507, 15
      %v577 = vsel %vm576, %v569, %v573
      %v578 = vsel %vm576, %v571, %v575
      %v579 = vsel %vm576, %v573, %v569
      %v580 = vsel %vm576, %v575, %v571
      %v581 = vperm.slane %v311, 2
      %v582 = vperm.slane %v312, 2
      %v583 = vmul.f32 %v579, %v581
      %v584 = vmul.f32 %v577, %v582
      %v585 = vmul.f32 %v580, %v581
      %v586 = vmul.f32 %v578, %v582
      %587 = vset.pattern.permute.xlu0 2
      %588 = vperm.xlu0 %587, %v496
      %v589 = vpop.permute.xlu0 %588
      %591 = vset.pattern.permute.xlu0 2
      %592 = vperm.xlu0 %591, %v497
      %v593 = vpop.permute.xlu0 %592
      %v595 = vmul.f32 %v583, %v589
      %v596 = vmul.f32 %v584, %v589
      %v597 = vmul.f32 %v585, %v593
      %v598 = vmul.f32 %v586, %v593
      %v599 = vadd.f32 %v564, %v595
      %v600 = vadd.f32 %v565, %v596
      %v601 = vadd.f32 %v566, %v597
      %v602 = vadd.f32 %v567, %v598
      %603 = vrot.lane.b32.xlu0 %v478, 1
      %v604 = vpop.permute.xlu0 %603
      %605 = vrot.lane.b32.xlu0 %v480, 1
      %v606 = vpop.permute.xlu0 %605
      %607 = vrot.lane.b32.xlu0 %v492, 1
      %v608 = vpop.permute.xlu0 %607
      %609 = vrot.lane.b32.xlu0 %v494, 1
      %v610 = vpop.permute.xlu0 %609
      %vm611 = vcmp.lt.s32.totalorder %v507, 1
      %v612 = vsel %vm611, %v604, %v608
      %v613 = vsel %vm611, %v606, %v610
      %v614 = vsel %vm611, %v608, %v604
      %v615 = vsel %vm611, %v610, %v606
      %v616 = vperm.slane %v311, 3
      %v617 = vperm.slane %v312, 3
      %v618 = vmul.f32 %v614, %v616
      %v619 = vmul.f32 %v612, %v617
      %v620 = vmul.f32 %v615, %v616
      %v621 = vmul.f32 %v613, %v617
      %622 = vset.pattern.permute.xlu0 3
      %623 = vperm.xlu0 %622, %v496
      %v624 = vpop.permute.xlu0 %623
      %626 = vset.pattern.permute.xlu0 3
      %627 = vperm.xlu0 %626, %v497
      %v628 = vpop.permute.xlu0 %627
      %v630 = vmul.f32 %v618, %v624
      %v631 = vmul.f32 %v619, %v624
      %v632 = vmul.f32 %v620, %v628
      %v633 = vmul.f32 %v621, %v628
      %v634 = vadd.f32 %v599, %v630
      %v635 = vadd.f32 %v600, %v631
      %v636 = vadd.f32 %v601, %v632
      %v637 = vadd.f32 %v602, %v633
      %638 = vset.pattern.permute.xlu0 4
      %639 = vperm.xlu0 %638, %v496
      %v640 = vpop.permute.xlu0 %639
      %642 = vset.pattern.permute.xlu0 4
      %643 = vperm.xlu0 %642, %v497
      %v644 = vpop.permute.xlu0 %643
      %v646 = vmul.f32 %v478, %v640
      %v647 = vmul.f32 %v492, %v640
      %v648 = vmul.f32 %v480, %v644
      %v649 = vmul.f32 %v494, %v644
      %v650 = vadd.f32 %v634, %v646
      %v651 = vadd.f32 %v635, %v647
      %v652 = vadd.f32 %v636, %v648
      %v653 = vadd.f32 %v637, %v649
      %654 = vrot.lane.b32.xlu0 %v478, 127
      %v655 = vpop.permute.xlu0 %654
      %656 = vrot.lane.b32.xlu0 %v480, 127
      %v657 = vpop.permute.xlu0 %656
      %658 = vrot.lane.b32.xlu0 %v492, 127
      %v659 = vpop.permute.xlu0 %658
      %660 = vrot.lane.b32.xlu0 %v494, 127
      %v661 = vpop.permute.xlu0 %660
      %vm662 = vcmp.lt.s32.totalorder %v507, 127
      %v663 = vsel %vm662, %v655, %v659
      %v664 = vsel %vm662, %v657, %v661
      %v665 = vsel %vm662, %v659, %v655
      %v666 = vsel %vm662, %v661, %v657
      %v667 = vperm.slane %v311, 5
      %v668 = vperm.slane %v312, 5
      %v669 = vmul.f32 %v663, %v667
      %v670 = vmul.f32 %v665, %v668
      %v671 = vmul.f32 %v664, %v667
      %v672 = vmul.f32 %v666, %v668
      %673 = vset.pattern.permute.xlu0 5
      %674 = vperm.xlu0 %673, %v496
      %v675 = vpop.permute.xlu0 %674
      %677 = vset.pattern.permute.xlu0 5
      %678 = vperm.xlu0 %677, %v497
      %v679 = vpop.permute.xlu0 %678
      %v681 = vmul.f32 %v669, %v675
      %v682 = vmul.f32 %v670, %v675
      %v683 = vmul.f32 %v671, %v679
      %v684 = vmul.f32 %v672, %v679
      %v685 = vadd.f32 %v650, %v681
      %v686 = vadd.f32 %v651, %v682
      %v687 = vadd.f32 %v652, %v683
      %v688 = vadd.f32 %v653, %v684
      %689 = vrot.lane.b32.xlu0 %v478, 113
      %v690 = vpop.permute.xlu0 %689
      %691 = vrot.lane.b32.xlu0 %v480, 113
      %v692 = vpop.permute.xlu0 %691
      %693 = vrot.lane.b32.xlu0 %v492, 113
      %v694 = vpop.permute.xlu0 %693
      %695 = vrot.lane.b32.xlu0 %v494, 113
      %v696 = vpop.permute.xlu0 %695
      %vm697 = vcmp.lt.s32.totalorder %v507, 113
      %v698 = vsel %vm697, %v690, %v694
      %v699 = vsel %vm697, %v692, %v696
      %v700 = vsel %vm697, %v694, %v690
      %v701 = vsel %vm697, %v696, %v692
      %v702 = vperm.slane %v311, 6
      %v703 = vperm.slane %v312, 6
      %v704 = vmul.f32 %v698, %v702
      %v705 = vmul.f32 %v700, %v703
      %v706 = vmul.f32 %v699, %v702
      %v707 = vmul.f32 %v701, %v703
      %708 = vset.pattern.permute.xlu0 6
      %709 = vperm.xlu0 %708, %v496
      %v710 = vpop.permute.xlu0 %709
      %712 = vset.pattern.permute.xlu0 6
      %713 = vperm.xlu0 %712, %v497
      %v714 = vpop.permute.xlu0 %713
      %v716 = vmul.f32 %v704, %v710
      %v717 = vmul.f32 %v705, %v710
      %v718 = vmul.f32 %v706, %v714
      %v719 = vmul.f32 %v707, %v714
      %v720 = vadd.f32 %v685, %v716
      %v721 = vadd.f32 %v686, %v717
      %v722 = vadd.f32 %v687, %v718
      %v723 = vadd.f32 %v688, %v719
      %724 = vrot.lane.b32.xlu0 %v478, 112
      %v725 = vpop.permute.xlu0 %724
      %726 = vrot.lane.b32.xlu0 %v480, 112
      %v727 = vpop.permute.xlu0 %726
      %728 = vrot.lane.b32.xlu0 %v492, 112
      %v729 = vpop.permute.xlu0 %728
      %730 = vrot.lane.b32.xlu0 %v494, 112
      %v731 = vpop.permute.xlu0 %730
      %vm732 = vcmp.lt.s32.totalorder %v507, 112
      %v733 = vsel %vm732, %v725, %v729
      %v734 = vsel %vm732, %v727, %v731
      %v735 = vsel %vm732, %v729, %v725
      %v736 = vsel %vm732, %v731, %v727
      %v737 = vperm.slane %v311, 7
      %v738 = vperm.slane %v312, 7
      %v739 = vmul.f32 %v733, %v737
      %v740 = vmul.f32 %v735, %v738
      %v741 = vmul.f32 %v734, %v737
      %v742 = vmul.f32 %v736, %v738
      %743 = vset.pattern.permute.xlu0 7
      %744 = vperm.xlu0 %743, %v496
      %v745 = vpop.permute.xlu0 %744
      %747 = vset.pattern.permute.xlu0 7
      %748 = vperm.xlu0 %747, %v497
      %v749 = vpop.permute.xlu0 %748
      %v751 = vmul.f32 %v739, %v745
      %v752 = vmul.f32 %v740, %v745
      %v753 = vmul.f32 %v741, %v749
      %v754 = vmul.f32 %v742, %v749
      %v755 = vadd.f32 %v720, %v751
      %v756 = vadd.f32 %v721, %v752
      %v757 = vadd.f32 %v722, %v753
      %v758 = vadd.f32 %v723, %v754
      %759 = vrot.lane.b32.xlu0 %v478, 111
      %v760 = vpop.permute.xlu0 %759
      %761 = vrot.lane.b32.xlu0 %v480, 111
      %v762 = vpop.permute.xlu0 %761
      %763 = vrot.lane.b32.xlu0 %v492, 111
      %v764 = vpop.permute.xlu0 %763
      %765 = vrot.lane.b32.xlu0 %v494, 111
      %v766 = vpop.permute.xlu0 %765
      %vm767 = vcmp.lt.s32.totalorder %v507, 111
      %v768 = vsel %vm767, %v760, %v764
      %v769 = vsel %vm767, %v762, %v766
      %v770 = vsel %vm767, %v764, %v760
      %v771 = vsel %vm767, %v766, %v762
      %v772 = vperm.slane %v313, 0
      %v773 = vperm.slane %v314, 0
      %v774 = vmul.f32 %v768, %v772
      %v775 = vmul.f32 %v770, %v773
      %v776 = vmul.f32 %v769, %v772
      %v777 = vmul.f32 %v771, %v773
      %778 = vset.pattern.permute.xlu0 8
      %779 = vperm.xlu0 %778, %v496
      %v780 = vpop.permute.xlu0 %779
      %782 = vset.pattern.permute.xlu0 8
      %783 = vperm.xlu0 %782, %v497
      %v784 = vpop.permute.xlu0 %783
      %v786 = vmul.f32 %v774, %v780
      %v787 = vmul.f32 %v775, %v780
      %v788 = vmul.f32 %v776, %v784
      %v789 = vmul.f32 %v777, %v784
      %v790 = vadd.f32 %v755, %v786
      %v791 = vadd.f32 %v756, %v787
      %v792 = vadd.f32 %v757, %v788
      %v793 = vadd.f32 %v758, %v789
      %v794 = vadd.f32 %v790, %v324
      %v795 = vadd.f32 %v791, %v324
      %v796 = vadd.f32 %v792, %v329
      %v797 = vadd.f32 %v793, %v329
      %v798 = vxor.u32 %v794, 2147483648
      %v799 = vxor.u32 %v795, 2147483648
      %v800 = vxor.u32 %v796, 2147483648
      %v801 = vxor.u32 %v797, 2147483648
      %v802 = vmul.f32 %v798, 1.442695
      %v803 = vpow.pop %v802
      %v804 = vmul.f32 %v799, 1.442695
      %v805 = vpow.pop %v804
      %v806 = vmul.f32 %v800, 1.442695
      %v807 = vpow.pop %v806
      %v808 = vmul.f32 %v801, 1.442695
      %v809 = vpow.pop %v808
      %v810 = vadd.f32 %v803, 1.0
      %v811 = vadd.f32 %v805, 1.0
      %v812 = vadd.f32 %v807, 1.0
      %v813 = vadd.f32 %v809, 1.0
      %v814 = vrcp.pop %v810
      %v815 = vmul.f32 %v810, %v814
      %v816 = vsub.f32 1.0, %v815
      %v817 = vmul.f32 %v814, %v816
      %v818 = vadd.f32 %v814, %v817
      %vm819 = vweird.f32 %v810
      %vm820 = vweird.f32 %v814
      %vm821 = vmor %vm819, %vm820
      %v822 = vsel %vm821, %v814, %v818
      %v823 = vand.u32 2147483647, %v810
      %vm824 = vcmp.eq.f32.partialorder %v823, 8.507059e+37
      %v825 = vand.u32 %v810, 2147483648
      %v826 = vor.u32 1.1754944e-38, %v825
      %v827 = vsel %vm824, %v826, %v822
      %v828 = vmul.f32 1.0, %v827
      %v829 = vrcp.pop %v811
      %v830 = vmul.f32 %v811, %v829
      %v831 = vsub.f32 1.0, %v830
      %v832 = vmul.f32 %v829, %v831
      %v833 = vadd.f32 %v829, %v832
      %vm834 = vweird.f32 %v811
      %vm835 = vweird.f32 %v829
      %vm836 = vmor %vm834, %vm835
      %v837 = vsel %vm836, %v829, %v833
      %v838 = vand.u32 2147483647, %v811
      %vm839 = vcmp.eq.f32.partialorder %v838, 8.507059e+37
      %v840 = vand.u32 %v811, 2147483648
      %v841 = vor.u32 1.1754944e-38, %v840
      %v842 = vsel %vm839, %v841, %v837
      %v843 = vmul.f32 1.0, %v842
      %v844 = vrcp.pop %v812
      %v845 = vmul.f32 %v812, %v844
      %v846 = vsub.f32 1.0, %v845
      %v847 = vmul.f32 %v844, %v846
      %v848 = vadd.f32 %v844, %v847
      %vm849 = vweird.f32 %v812
      %vm850 = vweird.f32 %v844
      %vm851 = vmor %vm849, %vm850
      %v852 = vsel %vm851, %v844, %v848
      %v853 = vand.u32 2147483647, %v812
      %vm854 = vcmp.eq.f32.partialorder %v853, 8.507059e+37
      %v855 = vand.u32 %v812, 2147483648
      %v856 = vor.u32 1.1754944e-38, %v855
      %v857 = vsel %vm854, %v856, %v852
      %v858 = vmul.f32 1.0, %v857
      %v859 = vrcp.pop %v813
      %v860 = vmul.f32 %v813, %v859
      %v861 = vsub.f32 1.0, %v860
      %v862 = vmul.f32 %v859, %v861
      %v863 = vadd.f32 %v859, %v862
      %vm864 = vweird.f32 %v813
      %vm865 = vweird.f32 %v859
      %vm866 = vmor %vm864, %vm865
      %v867 = vsel %vm866, %v859, %v863
      %v868 = vand.u32 2147483647, %v813
      %vm869 = vcmp.eq.f32.partialorder %v868, 8.507059e+37
      %v870 = vand.u32 %v813, 2147483648
      %v871 = vor.u32 1.1754944e-38, %v870
      %v872 = vsel %vm869, %v871, %v867
      %v873 = vmul.f32 1.0, %v872
      %v874 = vmul.f32 %v794, %v828
      %v875 = vmul.f32 %v795, %v843
      %v876 = vmul.f32 %v796, %v858
      %v877 = vmul.f32 %v797, %v873
      %s878 = scalar_lea.vmem %s2, 8
      %v879 = vld [vmem:[%s878] sm:$0xf]
      %v880 = vld [vmem:[%s878 + $0x4] sm:$0x3]
      %v881 = vpack.c.bf16 %v876, %v874
      %v882 = vpack.c.bf16 %v877, %v875
      %v885 = vunpack.c.l.b16 %v879
      %v886 = vunpack.c.l.b16 %v880
      %v887 = vpack.c.b16 %v886, %v885
      %v889 = vsel %vm457, %v887, 0
      %v892 = vsel %vm461, %v881, 0
      %v895 = vsel %vm461, %v882, 0
      %897 = vmatpush.bf16.msra.mxu0 0
      %898 = vmatpush.bf16.msra.mxu0 0
      %899 = vmatpush.bf16.msra.mxu0 0
      %900 = vmatpush.bf16.msra.mxu0 0
      %901 = vmatpush.bf16.msra.mxu0 0
      %902 = vmatpush.bf16.msra.mxu0 0
      %903 = vmatpush.bf16.msra.mxu0 0
      %904 = vmatpush.bf16.msra.mxu0 %v892
      %905 = vmatmul.bf16.gmra.mxu0 %v889
      %v906 = vpop.f32.mrf.mxu0
      %v907 = vadd.f32 0.0, %v906
      %v908 = vpop.f32.mrf.mxu0
      %v909 = vadd.f32 0.0, %v908
      %910 = vdwg.mxu0
      %911 = vmatpush.bf16.msra.mxu0 0
      %912 = vmatpush.bf16.msra.mxu0 0
      %913 = vmatpush.bf16.msra.mxu0 0
      %914 = vmatpush.bf16.msra.mxu0 0
      %915 = vmatpush.bf16.msra.mxu0 0
      %916 = vmatpush.bf16.msra.mxu0 0
      %917 = vmatpush.bf16.msra.mxu0 0
      %918 = vmatpush.bf16.msra.mxu0 %v895
      %919 = vmatmul.bf16.gmra.mxu0 %v889
      %v920 = vpop.f32.mrf.mxu0
      %v921 = vadd.f32 0.0, %v920
      %v922 = vpop.f32.mrf.mxu0
      %v923 = vadd.f32 0.0, %v922
      %924 = vdwg.mxu0
      %s925 = scalar_lea.vmem %s3, 16
      %v926 = vld [vmem:[%s925] sm:$0xff]
      %v927 = vld [vmem:[%s925 + $0x8] sm:$0xf]
      %928 = vrot.lane.b32.xlu0 %v907, 17
      %v929 = vpop.permute.xlu0 %928
      %930 = vrot.lane.b32.xlu0 %v909, 17
      %v931 = vpop.permute.xlu0 %930
      %932 = vrot.lane.b32.xlu0 %v921, 17
      %v933 = vpop.permute.xlu0 %932
      %934 = vrot.lane.b32.xlu0 %v923, 17
      %v935 = vpop.permute.xlu0 %934
      %v936 = vsel %vm508, %v929, %v933
      %v937 = vsel %vm508, %v931, %v935
      %v938 = vsel %vm508, %v933, %v929
      %v939 = vsel %vm508, %v935, %v931
      %v940 = vmul.f32 %v938, %v513
      %v941 = vmul.f32 %v936, %v514
      %v942 = vmul.f32 %v939, %v513
      %v943 = vmul.f32 %v937, %v514
      %945 = vset.pattern.permute.xlu0 0
      %946 = vperm.xlu0 %945, %v926
      %v947 = vpop.permute.xlu0 %946
      %950 = vset.pattern.permute.xlu0 0
      %951 = vperm.xlu0 %950, %v927
      %v952 = vpop.permute.xlu0 %951
      %v954 = vmul.f32 %v940, %v947
      %v955 = vmul.f32 %v941, %v947
      %v956 = vmul.f32 %v942, %v952
      %v957 = vmul.f32 %v943, %v952
      %958 = vrot.lane.b32.xlu0 %v907, 16
      %v959 = vpop.permute.xlu0 %958
      %960 = vrot.lane.b32.xlu0 %v909, 16
      %v961 = vpop.permute.xlu0 %960
      %962 = vrot.lane.b32.xlu0 %v921, 16
      %v963 = vpop.permute.xlu0 %962
      %964 = vrot.lane.b32.xlu0 %v923, 16
      %v965 = vpop.permute.xlu0 %964
      %v966 = vsel %vm541, %v959, %v963
      %v967 = vsel %vm541, %v961, %v965
      %v968 = vsel %vm541, %v963, %v959
      %v969 = vsel %vm541, %v965, %v961
      %v970 = vmul.f32 %v968, %v546
      %v971 = vmul.f32 %v966, %v547
      %v972 = vmul.f32 %v969, %v546
      %v973 = vmul.f32 %v967, %v547
      %974 = vset.pattern.permute.xlu0 1
      %975 = vperm.xlu0 %974, %v926
      %v976 = vpop.permute.xlu0 %975
      %978 = vset.pattern.permute.xlu0 1
      %979 = vperm.xlu0 %978, %v927
      %v980 = vpop.permute.xlu0 %979
      %v982 = vmul.f32 %v970, %v976
      %v983 = vmul.f32 %v971, %v976
      %v984 = vmul.f32 %v972, %v980
      %v985 = vmul.f32 %v973, %v980
      %v986 = vadd.f32 %v954, %v982
      %v987 = vadd.f32 %v955, %v983
      %v988 = vadd.f32 %v956, %v984
      %v989 = vadd.f32 %v957, %v985
      %990 = vrot.lane.b32.xlu0 %v907, 15
      %v991 = vpop.permute.xlu0 %990
      %992 = vrot.lane.b32.xlu0 %v909, 15
      %v993 = vpop.permute.xlu0 %992
      %994 = vrot.lane.b32.xlu0 %v921, 15
      %v995 = vpop.permute.xlu0 %994
      %996 = vrot.lane.b32.xlu0 %v923, 15
      %v997 = vpop.permute.xlu0 %996
      %v998 = vsel %vm576, %v991, %v995
      %v999 = vsel %vm576, %v993, %v997
      %v1000 = vsel %vm576, %v995, %v991
      %v1001 = vsel %vm576, %v997, %v993
      %v1002 = vmul.f32 %v1000, %v581
      %v1003 = vmul.f32 %v998, %v582
      %v1004 = vmul.f32 %v1001, %v581
      %v1005 = vmul.f32 %v999, %v582
      %1006 = vset.pattern.permute.xlu0 2
      %1007 = vperm.xlu0 %1006, %v926
      %v1008 = vpop.permute.xlu0 %1007
      %1010 = vset.pattern.permute.xlu0 2
      %1011 = vperm.xlu0 %1010, %v927
      %v1012 = vpop.permute.xlu0 %1011
      %v1014 = vmul.f32 %v1002, %v1008
      %v1015 = vmul.f32 %v1003, %v1008
      %v1016 = vmul.f32 %v1004, %v1012
      %v1017 = vmul.f32 %v1005, %v1012
      %v1018 = vadd.f32 %v986, %v1014
      %v1019 = vadd.f32 %v987, %v1015
      %v1020 = vadd.f32 %v988, %v1016
      %v1021 = vadd.f32 %v989, %v1017
      %1022 = vrot.lane.b32.xlu0 %v907, 1
      %v1023 = vpop.permute.xlu0 %1022
      %1024 = vrot.lane.b32.xlu0 %v909, 1
      %v1025 = vpop.permute.xlu0 %1024
      %1026 = vrot.lane.b32.xlu0 %v921, 1
      %v1027 = vpop.permute.xlu0 %1026
      %1028 = vrot.lane.b32.xlu0 %v923, 1
      %v1029 = vpop.permute.xlu0 %1028
      %v1030 = vsel %vm611, %v1023, %v1027
      %v1031 = vsel %vm611, %v1025, %v1029
      %v1032 = vsel %vm611, %v1027, %v1023
      %v1033 = vsel %vm611, %v1029, %v1025
      %v1034 = vmul.f32 %v1032, %v616
      %v1035 = vmul.f32 %v1030, %v617
      %v1036 = vmul.f32 %v1033, %v616
      %v1037 = vmul.f32 %v1031, %v617
      %1038 = vset.pattern.permute.xlu0 3
      %1039 = vperm.xlu0 %1038, %v926
      %v1040 = vpop.permute.xlu0 %1039
      %1042 = vset.pattern.permute.xlu0 3
      %1043 = vperm.xlu0 %1042, %v927
      %v1044 = vpop.permute.xlu0 %1043
      %v1046 = vmul.f32 %v1034, %v1040
      %v1047 = vmul.f32 %v1035, %v1040
      %v1048 = vmul.f32 %v1036, %v1044
      %v1049 = vmul.f32 %v1037, %v1044
      %v1050 = vadd.f32 %v1018, %v1046
      %v1051 = vadd.f32 %v1019, %v1047
      %v1052 = vadd.f32 %v1020, %v1048
      %v1053 = vadd.f32 %v1021, %v1049
      %1054 = vset.pattern.permute.xlu0 4
      %1055 = vperm.xlu0 %1054, %v926
      %v1056 = vpop.permute.xlu0 %1055
      %1058 = vset.pattern.permute.xlu0 4
      %1059 = vperm.xlu0 %1058, %v927
      %v1060 = vpop.permute.xlu0 %1059
      %v1062 = vmul.f32 %v907, %v1056
      %v1063 = vmul.f32 %v921, %v1056
      %v1064 = vmul.f32 %v909, %v1060
      %v1065 = vmul.f32 %v923, %v1060
      %v1066 = vadd.f32 %v1050, %v1062
      %v1067 = vadd.f32 %v1051, %v1063
      %v1068 = vadd.f32 %v1052, %v1064
      %v1069 = vadd.f32 %v1053, %v1065
      %1070 = vrot.lane.b32.xlu0 %v907, 127
      %v1071 = vpop.permute.xlu0 %1070
      %1072 = vrot.lane.b32.xlu0 %v909, 127
      %v1073 = vpop.permute.xlu0 %1072
      %1074 = vrot.lane.b32.xlu0 %v921, 127
      %v1075 = vpop.permute.xlu0 %1074
      %1076 = vrot.lane.b32.xlu0 %v923, 127
      %v1077 = vpop.permute.xlu0 %1076
      %v1078 = vsel %vm662, %v1071, %v1075
      %v1079 = vsel %vm662, %v1073, %v1077
      %v1080 = vsel %vm662, %v1075, %v1071
      %v1081 = vsel %vm662, %v1077, %v1073
      %v1082 = vmul.f32 %v1078, %v667
      %v1083 = vmul.f32 %v1080, %v668
      %v1084 = vmul.f32 %v1079, %v667
      %v1085 = vmul.f32 %v1081, %v668
      %1086 = vset.pattern.permute.xlu0 5
      %1087 = vperm.xlu0 %1086, %v926
      %v1088 = vpop.permute.xlu0 %1087
      %1090 = vset.pattern.permute.xlu0 5
      %1091 = vperm.xlu0 %1090, %v927
      %v1092 = vpop.permute.xlu0 %1091
      %v1094 = vmul.f32 %v1082, %v1088
      %v1095 = vmul.f32 %v1083, %v1088
      %v1096 = vmul.f32 %v1084, %v1092
      %v1097 = vmul.f32 %v1085, %v1092
      %v1098 = vadd.f32 %v1066, %v1094
      %v1099 = vadd.f32 %v1067, %v1095
      %v1100 = vadd.f32 %v1068, %v1096
      %v1101 = vadd.f32 %v1069, %v1097
      %1102 = vrot.lane.b32.xlu0 %v907, 113
      %v1103 = vpop.permute.xlu0 %1102
      %1104 = vrot.lane.b32.xlu0 %v909, 113
      %v1105 = vpop.permute.xlu0 %1104
      %1106 = vrot.lane.b32.xlu0 %v921, 113
      %v1107 = vpop.permute.xlu0 %1106
      %1108 = vrot.lane.b32.xlu0 %v923, 113
      %v1109 = vpop.permute.xlu0 %1108
      %v1110 = vsel %vm697, %v1103, %v1107
      %v1111 = vsel %vm697, %v1105, %v1109
      %v1112 = vsel %vm697, %v1107, %v1103
      %v1113 = vsel %vm697, %v1109, %v1105
      %v1114 = vmul.f32 %v1110, %v702
      %v1115 = vmul.f32 %v1112, %v703
      %v1116 = vmul.f32 %v1111, %v702
      %v1117 = vmul.f32 %v1113, %v703
      %1118 = vset.pattern.permute.xlu0 6
      %1119 = vperm.xlu0 %1118, %v926
      %v1120 = vpop.permute.xlu0 %1119
      %1122 = vset.pattern.permute.xlu0 6
      %1123 = vperm.xlu0 %1122, %v927
      %v1124 = vpop.permute.xlu0 %1123
      %v1126 = vmul.f32 %v1114, %v1120
      %v1127 = vmul.f32 %v1115, %v1120
      %v1128 = vmul.f32 %v1116, %v1124
      %v1129 = vmul.f32 %v1117, %v1124
      %v1130 = vadd.f32 %v1098, %v1126
      %v1131 = vadd.f32 %v1099, %v1127
      %v1132 = vadd.f32 %v1100, %v1128
      %v1133 = vadd.f32 %v1101, %v1129
      %1134 = vrot.lane.b32.xlu0 %v907, 112
      %v1135 = vpop.permute.xlu0 %1134
      %1136 = vrot.lane.b32.xlu0 %v909, 112
      %v1137 = vpop.permute.xlu0 %1136
      %1138 = vrot.lane.b32.xlu0 %v921, 112
      %v1139 = vpop.permute.xlu0 %1138
      %1140 = vrot.lane.b32.xlu0 %v923, 112
      %v1141 = vpop.permute.xlu0 %1140
      %v1142 = vsel %vm732, %v1135, %v1139
      %v1143 = vsel %vm732, %v1137, %v1141
      %v1144 = vsel %vm732, %v1139, %v1135
      %v1145 = vsel %vm732, %v1141, %v1137
      %v1146 = vmul.f32 %v1142, %v737
      %v1147 = vmul.f32 %v1144, %v738
      %v1148 = vmul.f32 %v1143, %v737
      %v1149 = vmul.f32 %v1145, %v738
      %1150 = vset.pattern.permute.xlu0 7
      %1151 = vperm.xlu0 %1150, %v926
      %v1152 = vpop.permute.xlu0 %1151
      %1154 = vset.pattern.permute.xlu0 7
      %1155 = vperm.xlu0 %1154, %v927
      %v1156 = vpop.permute.xlu0 %1155
      %v1158 = vmul.f32 %v1146, %v1152
      %v1159 = vmul.f32 %v1147, %v1152
      %v1160 = vmul.f32 %v1148, %v1156
      %v1161 = vmul.f32 %v1149, %v1156
      %v1162 = vadd.f32 %v1130, %v1158
      %v1163 = vadd.f32 %v1131, %v1159
      %v1164 = vadd.f32 %v1132, %v1160
      %v1165 = vadd.f32 %v1133, %v1161
      %1166 = vrot.lane.b32.xlu0 %v907, 111
      %v1167 = vpop.permute.xlu0 %1166
      %1168 = vrot.lane.b32.xlu0 %v909, 111
      %v1169 = vpop.permute.xlu0 %1168
      %1170 = vrot.lane.b32.xlu0 %v921, 111
      %v1171 = vpop.permute.xlu0 %1170
      %1172 = vrot.lane.b32.xlu0 %v923, 111
      %v1173 = vpop.permute.xlu0 %1172
      %v1174 = vsel %vm767, %v1167, %v1171
      %v1175 = vsel %vm767, %v1169, %v1173
      %v1176 = vsel %vm767, %v1171, %v1167
      %v1177 = vsel %vm767, %v1173, %v1169
      %v1178 = vmul.f32 %v1174, %v772
      %v1179 = vmul.f32 %v1176, %v773
      %v1180 = vmul.f32 %v1175, %v772
      %v1181 = vmul.f32 %v1177, %v773
      %1182 = vset.pattern.permute.xlu0 8
      %1183 = vperm.xlu0 %1182, %v926
      %v1184 = vpop.permute.xlu0 %1183
      %1186 = vset.pattern.permute.xlu0 8
      %1187 = vperm.xlu0 %1186, %v927
      %v1188 = vpop.permute.xlu0 %1187
      %v1190 = vmul.f32 %v1178, %v1184
      %v1191 = vmul.f32 %v1179, %v1184
      %v1192 = vmul.f32 %v1180, %v1188
      %v1193 = vmul.f32 %v1181, %v1188
      %v1194 = vadd.f32 %v1162, %v1190
      %v1195 = vadd.f32 %v1163, %v1191
      %v1196 = vadd.f32 %v1164, %v1192
      %v1197 = vadd.f32 %v1165, %v1193
      %v1198 = vadd.f32 %v1194, %v324
      %v1199 = vadd.f32 %v1195, %v324
      %v1200 = vadd.f32 %v1196, %v329
      %v1201 = vadd.f32 %v1197, %v329
      %v1202 = vxor.u32 %v1198, 2147483648
      %v1203 = vxor.u32 %v1199, 2147483648
      %v1204 = vxor.u32 %v1200, 2147483648
      %v1205 = vxor.u32 %v1201, 2147483648
      %v1206 = vmul.f32 %v1202, 1.442695
      %v1207 = vpow.pop %v1206
      %v1208 = vmul.f32 %v1203, 1.442695
      %v1209 = vpow.pop %v1208
      %v1210 = vmul.f32 %v1204, 1.442695
      %v1211 = vpow.pop %v1210
      %v1212 = vmul.f32 %v1205, 1.442695
      %v1213 = vpow.pop %v1212
      %v1214 = vadd.f32 %v1207, 1.0
      %v1215 = vadd.f32 %v1209, 1.0
      %v1216 = vadd.f32 %v1211, 1.0
      %v1217 = vadd.f32 %v1213, 1.0
      %v1218 = vrcp.pop %v1214
      %v1219 = vmul.f32 %v1214, %v1218
      %v1220 = vsub.f32 1.0, %v1219
      %v1221 = vmul.f32 %v1218, %v1220
      %v1222 = vadd.f32 %v1218, %v1221
      %vm1223 = vweird.f32 %v1214
      %vm1224 = vweird.f32 %v1218
      %vm1225 = vmor %vm1223, %vm1224
      %v1226 = vsel %vm1225, %v1218, %v1222
      %v1227 = vand.u32 2147483647, %v1214
      %vm1228 = vcmp.eq.f32.partialorder %v1227, 8.507059e+37
      %v1229 = vand.u32 %v1214, 2147483648
      %v1230 = vor.u32 1.1754944e-38, %v1229
      %v1231 = vsel %vm1228, %v1230, %v1226
      %v1232 = vmul.f32 1.0, %v1231
      %v1233 = vrcp.pop %v1215
      %v1234 = vmul.f32 %v1215, %v1233
      %v1235 = vsub.f32 1.0, %v1234
      %v1236 = vmul.f32 %v1233, %v1235
      %v1237 = vadd.f32 %v1233, %v1236
      %vm1238 = vweird.f32 %v1215
      %vm1239 = vweird.f32 %v1233
      %vm1240 = vmor %vm1238, %vm1239
      %v1241 = vsel %vm1240, %v1233, %v1237
      %v1242 = vand.u32 2147483647, %v1215
      %vm1243 = vcmp.eq.f32.partialorder %v1242, 8.507059e+37
      %v1244 = vand.u32 %v1215, 2147483648
      %v1245 = vor.u32 1.1754944e-38, %v1244
      %v1246 = vsel %vm1243, %v1245, %v1241
      %v1247 = vmul.f32 1.0, %v1246
      %v1248 = vrcp.pop %v1216
      %v1249 = vmul.f32 %v1216, %v1248
      %v1250 = vsub.f32 1.0, %v1249
      %v1251 = vmul.f32 %v1248, %v1250
      %v1252 = vadd.f32 %v1248, %v1251
      %vm1253 = vweird.f32 %v1216
      %vm1254 = vweird.f32 %v1248
      %vm1255 = vmor %vm1253, %vm1254
      %v1256 = vsel %vm1255, %v1248, %v1252
      %v1257 = vand.u32 2147483647, %v1216
      %vm1258 = vcmp.eq.f32.partialorder %v1257, 8.507059e+37
      %v1259 = vand.u32 %v1216, 2147483648
      %v1260 = vor.u32 1.1754944e-38, %v1259
      %v1261 = vsel %vm1258, %v1260, %v1256
      %v1262 = vmul.f32 1.0, %v1261
      %v1263 = vrcp.pop %v1217
      %v1264 = vmul.f32 %v1217, %v1263
      %v1265 = vsub.f32 1.0, %v1264
      %v1266 = vmul.f32 %v1263, %v1265
      %v1267 = vadd.f32 %v1263, %v1266
      %vm1268 = vweird.f32 %v1217
      %vm1269 = vweird.f32 %v1263
      %vm1270 = vmor %vm1268, %vm1269
      %v1271 = vsel %vm1270, %v1263, %v1267
      %v1272 = vand.u32 2147483647, %v1217
      %vm1273 = vcmp.eq.f32.partialorder %v1272, 8.507059e+37
      %v1274 = vand.u32 %v1217, 2147483648
      %v1275 = vor.u32 1.1754944e-38, %v1274
      %v1276 = vsel %vm1273, %v1275, %v1271
      %v1277 = vmul.f32 1.0, %v1276
      %v1278 = vmul.f32 %v1198, %v1232
      %v1279 = vmul.f32 %v1199, %v1247
      %v1280 = vmul.f32 %v1200, %v1262
      %v1281 = vmul.f32 %v1201, %v1277
      %v1282 = vadd.f32 %v1278, %v444
      %v1283 = vadd.f32 %v1279, %v445
      %v1284 = vadd.f32 %v1280, %v446
      %v1285 = vadd.f32 %v1281, %v447
      %v1286 = vld [vmem:[%s4] sm:$0xf]
      %v1287 = vld [vmem:[%s4 + $0x4] sm:$0xf]
      %v1288 = vpack.c.bf16 %v1284, %v1282
      %v1289 = vpack.c.bf16 %v1285, %v1283
      %v1290 = vld [vmem:[%s7] sm:$0xff]
      %v1291 = vld [vmem:[%s7 + $0x8] sm:$0xff]
      %1293 = vset.pattern.permute.xlu0 0
      %1294 = vperm.xlu0 %1293, %v1290
      %v1295 = vpop.permute.xlu0 %1294
      %1298 = vset.pattern.permute.xlu0 0
      %1299 = vperm.xlu0 %1298, %v1291
      %v1300 = vpop.permute.xlu0 %1299
      %v1304 = vunpack.c.l.b16 %v1286
      %v1305 = vunpack.c.l.b16 %v1287
      %v1306 = vpack.c.b16 %v1305, %v1304
      %v1308 = vsel %vm457, %v1306, 0
      %v1311 = vsel %vm461, %v1288, 0
      %v1314 = vsel %vm461, %v1289, 0
      %1316 = vmatpush.bf16.msra.mxu0 0
      %1317 = vmatpush.bf16.msra.mxu0 0
      %1318 = vmatpush.bf16.msra.mxu0 0
      %1319 = vmatpush.bf16.msra.mxu0 0
      %1320 = vmatpush.bf16.msra.mxu0 0
      %1321 = vmatpush.bf16.msra.mxu0 0
      %1322 = vmatpush.bf16.msra.mxu0 0
      %1323 = vmatpush.bf16.msra.mxu0 %v1311
      %1324 = vmatmul.bf16.gmra.mxu0 %v1308
      %v1325 = vpop.f32.mrf.mxu0
      %v1326 = vadd.f32 %v1295, %v1325
      %v1327 = vpop.f32.mrf.mxu0
      %v1328 = vadd.f32 %v1300, %v1327
      %1329 = vdwg.mxu0
      %1330 = vmatpush.bf16.msra.mxu0 0
      %1331 = vmatpush.bf16.msra.mxu0 0
      %1332 = vmatpush.bf16.msra.mxu0 0
      %1333 = vmatpush.bf16.msra.mxu0 0
      %1334 = vmatpush.bf16.msra.mxu0 0
      %1335 = vmatpush.bf16.msra.mxu0 0
      %1336 = vmatpush.bf16.msra.mxu0 0
      %1337 = vmatpush.bf16.msra.mxu0 %v1314
      %1338 = vmatmul.bf16.gmra.mxu0 %v1308
      %v1339 = vpop.f32.mrf.mxu0
      %v1340 = vadd.f32 %v1295, %v1339
      %v1341 = vpop.f32.mrf.mxu0
      %v1342 = vadd.f32 %v1300, %v1341
      %1343 = vdwg.mxu0
      %v1344 = vxor.u32 %v1326, 2147483648
      %v1345 = vxor.u32 %v1340, 2147483648
      %v1346 = vxor.u32 %v1328, 2147483648
      %v1347 = vxor.u32 %v1342, 2147483648
      %v1348 = vmul.f32 %v1344, 1.442695
      %v1349 = vpow.pop %v1348
      %v1350 = vmul.f32 %v1345, 1.442695
      %v1351 = vpow.pop %v1350
      %v1352 = vmul.f32 %v1346, 1.442695
      %v1353 = vpow.pop %v1352
      %v1354 = vmul.f32 %v1347, 1.442695
      %v1355 = vpow.pop %v1354
      %v1356 = vadd.f32 %v1349, 1.0
      %v1357 = vadd.f32 %v1351, 1.0
      %v1358 = vadd.f32 %v1353, 1.0
      %v1359 = vadd.f32 %v1355, 1.0
      %v1360 = vrcp.pop %v1356
      %v1361 = vmul.f32 %v1356, %v1360
      %v1362 = vsub.f32 1.0, %v1361
      %v1363 = vmul.f32 %v1360, %v1362
      %v1364 = vadd.f32 %v1360, %v1363
      %vm1365 = vweird.f32 %v1356
      %vm1366 = vweird.f32 %v1360
      %vm1367 = vmor %vm1365, %vm1366
      %v1368 = vsel %vm1367, %v1360, %v1364
      %v1369 = vand.u32 2147483647, %v1356
      %vm1370 = vcmp.eq.f32.partialorder %v1369, 8.507059e+37
      %v1371 = vand.u32 %v1356, 2147483648
      %v1372 = vor.u32 1.1754944e-38, %v1371
      %v1373 = vsel %vm1370, %v1372, %v1368
      %v1374 = vmul.f32 1.0, %v1373
      %v1375 = vrcp.pop %v1357
      %v1376 = vmul.f32 %v1357, %v1375
      %v1377 = vsub.f32 1.0, %v1376
      %v1378 = vmul.f32 %v1375, %v1377
      %v1379 = vadd.f32 %v1375, %v1378
      %vm1380 = vweird.f32 %v1357
      %vm1381 = vweird.f32 %v1375
      %vm1382 = vmor %vm1380, %vm1381
      %v1383 = vsel %vm1382, %v1375, %v1379
      %v1384 = vand.u32 2147483647, %v1357
      %vm1385 = vcmp.eq.f32.partialorder %v1384, 8.507059e+37
      %v1386 = vand.u32 %v1357, 2147483648
      %v1387 = vor.u32 1.1754944e-38, %v1386
      %v1388 = vsel %vm1385, %v1387, %v1383
      %v1389 = vmul.f32 1.0, %v1388
      %v1390 = vrcp.pop %v1358
      %v1391 = vmul.f32 %v1358, %v1390
      %v1392 = vsub.f32 1.0, %v1391
      %v1393 = vmul.f32 %v1390, %v1392
      %v1394 = vadd.f32 %v1390, %v1393
      %vm1395 = vweird.f32 %v1358
      %vm1396 = vweird.f32 %v1390
      %vm1397 = vmor %vm1395, %vm1396
      %v1398 = vsel %vm1397, %v1390, %v1394
      %v1399 = vand.u32 2147483647, %v1358
      %vm1400 = vcmp.eq.f32.partialorder %v1399, 8.507059e+37
      %v1401 = vand.u32 %v1358, 2147483648
      %v1402 = vor.u32 1.1754944e-38, %v1401
      %v1403 = vsel %vm1400, %v1402, %v1398
      %v1404 = vmul.f32 1.0, %v1403
      %v1405 = vrcp.pop %v1359
      %v1406 = vmul.f32 %v1359, %v1405
      %v1407 = vsub.f32 1.0, %v1406
      %v1408 = vmul.f32 %v1405, %v1407
      %v1409 = vadd.f32 %v1405, %v1408
      %vm1410 = vweird.f32 %v1359
      %vm1411 = vweird.f32 %v1405
      %vm1412 = vmor %vm1410, %vm1411
      %v1413 = vsel %vm1412, %v1405, %v1409
      %v1414 = vand.u32 2147483647, %v1359
      %vm1415 = vcmp.eq.f32.partialorder %v1414, 8.507059e+37
      %v1416 = vand.u32 %v1359, 2147483648
      %v1417 = vor.u32 1.1754944e-38, %v1416
      %v1418 = vsel %vm1415, %v1417, %v1413
      %v1419 = vmul.f32 1.0, %v1418
      %v1420 = vmul.f32 %v1326, %v1374
      %v1421 = vmul.f32 %v1340, %v1389
      %v1422 = vmul.f32 %v1328, %v1404
      %v1423 = vmul.f32 %v1342, %v1419
      %v1424 = vadd.f32 %v1420, %v307
      %v1425 = vadd.f32 %v1421, %v308
      %v1426 = vadd.f32 %v1422, %v309
      %v1427 = vadd.f32 %v1423, %v310
      %1428 = vst [vmem:[%s305] sm:$0xff] %v1424
      %1429 = vst [vmem:[%s305 + $0x8] sm:$0xff] %v1425
      %1430 = vst [vmem:[%s305 + $0x10] sm:$0xff] %v1426
      %1431 = vst [vmem:[%s305 + $0x18] sm:$0xff] %v1427
      %p1432 = scmp.lt.s32.totalorder %s19, 1
      %s1433 = scalar_select %p1432, %s19, 1
      %s1434 = smul.addr %s1433, 4
      %s1435 = smul.addr %s1434, 8
      %s1436 = scalar_lea.vmem %s8, %s1435
      // Predicated region
      $region53: #{pdrre_block_forward.1} parent=51 // pred_check
        %p1437 = pneg %p210
      $region54: #{pdrre_block_forward.1} parent=51 // pred_check_branch
        %1439 = sbr.rel (%p1437) target = $region56
      $region55: #{pdrre_block_forward.1} parent=51 // pred_region
        _
      $region56: #{pdrre_block_forward.1} parent=51 // pred_fallthru
        _
    $region52: #{pdrre_block_forward.1} parent=5 // pred_fallthru
      _
    %p1440 = scmp.le.s32.totalorder 2, %s14
    // Predicated region
    $region57: #{pdrre_block_forward.1} parent=5 // pred_check
      %p1441 = pneg %p1440
    $region58: #{pdrre_block_forward.1} parent=5 // pred_check_branch
      %1443 = sbr.rel (%p1441) target = $region60
    $region59: #{pdrre_block_forward.1} parent=5 // pred_region
      %s1444 = ssub.s32 %s14, 2
      // Predicated region
      $region61: #{pdrre_block_forward.1} parent=59 // pred_check
        %p1445 = pneg %p216
      $region62: #{pdrre_block_forward.1} parent=59 // pred_check_branch
        %1447 = sbr.rel (%p1445) target = $region64
      $region63: #{pdrre_block_forward.1} parent=59 // pred_region
        %p1448 = scmp.lt.s32.totalorder %s20, 1
        %s1449 = scalar_select %p1448, %s20, 1
        %s1450 = smul.addr %s1449, 4
        %s1451 = smul.addr %s1450, 8
        %s1452 = scalar_lea.vmem %s8, %s1451
      $region64: #{pdrre_block_forward.1} parent=59 // pred_fallthru
        _
    $region60: #{pdrre_block_forward.1} parent=5 // pred_fallthru
      _
  $region6: #{pdrre_block_forward.1} parent=0 // loop_footer
    %s18 = sadd.s32 1, %s14
  $region7: #{pdrre_block_forward.1} parent=0 // loop_footer_branch
    %13 = sbr.rel target = $region3
  $region8: #{pdrre_block_forward.1} parent=0 // loop_exit
    _

</llo_original>
